<compile_context>
chip_gen: v6e
topology: v6e:2x2x1
jax: 0.10.0
libtpu: 0.0.40
codegen_flags: <defaults>
</compile_context>

<pallas_src>
import functools

import jax
import jax.numpy as jnp
from jax.experimental import pallas as pl
from jax.experimental.pallas import tpu as pltpu


def _autoencoder_kernel(
    x_ref,                    # [tb, input_dim]            f32
    we1_ref, be1_ref,         # [in, hid] bf16, [1, hid]   f32
    we2_ref, be2_ref,         # [hid, lat] bf16, [1, lat]  f32
    wz_ref, bz_ref,           # fused dec1|sup1: [lat, hid+half] bf16, [1, hid+half] f32
    wd2_ref, bd2_ref,         # [hid, in] bf16, [1, in]    f32
    ws2_ref, bs2_ref,         # [1, half] f32, [1, 1]      f32
    out_ref,                  # packed [tb, out_w]         f32
):
    hidden_dim = we1_ref.shape[1]
    latent_dim = we2_ref.shape[1]
    input_dim = wd2_ref.shape[1]
    half_dim = ws2_ref.shape[1]
    out_w = out_ref.shape[1]
    tb = x_ref.shape[0]
    packed_cols = input_dim + latent_dim + 1

    bf16 = jnp.bfloat16
    x = x_ref[...].astype(bf16)

    # --- encoder: Linear -> ReLU -> Linear ---
    h1 = jnp.dot(x, we1_ref[...], preferred_element_type=jnp.float32) + be1_ref[...]
    h1 = jnp.maximum(h1, 0.0)
    z = jnp.dot(h1.astype(bf16), we2_ref[...],
                preferred_element_type=jnp.float32) + be2_ref[...]

    # --- fused (decoder layer 1 | supervised-head layer 1), both use z as LHS ---
    hz = jnp.dot(z.astype(bf16), wz_ref[...],
                 preferred_element_type=jnp.float32) + bz_ref[...]
    hz = jnp.maximum(hz, 0.0)
    h_dec = hz[:, :hidden_dim]
    h_sup = hz[:, hidden_dim:hidden_dim + half_dim]

    # --- decoder layer 2 ---
    x_rec = jnp.dot(h_dec.astype(bf16), wd2_ref[...],
                    preferred_element_type=jnp.float32) + bd2_ref[...]

    # --- supervised head layer 2 (out dim = 1): VPU mul + lane reduce ---
    fp = jnp.sum(h_sup * ws2_ref[...], axis=-1, keepdims=True) + bs2_ref[...]

    # --- single unmasked full-width (128-lane) store of the packed slab.
    # Concat lane-shuffles land on the XLU (slack); the store uses the vst slot
    # once per vreg row instead of 4 masked partial stores.
    if out_w > packed_cols:
        pad = jnp.zeros((tb, out_w - packed_cols), jnp.float32)
        slab = jnp.concatenate([x_rec, z, fp, pad], axis=-1)
    else:
        slab = jnp.concatenate([x_rec, z, fp], axis=-1)
    out_ref[...] = slab.astype(out_ref.dtype)


def _round_up(a, b):
    return (a + b - 1) // b * b


def _pick_block_b(B):
    """Largest batch tile: 1 tile on v5e/v6e (1 TC), an even split on v7x (2 TCs).

    Cap at 2048 rows so (in 256 KB + out 1 MB, double-buffered) + ~5 MB of f32
    intermediates stays far below v5e's 16 MiB default scoped VMEM.
    """
    try:
        kind = jax.devices()[0].device_kind.lower()
    except Exception:  # pragma: no cover - defensive
        kind = ""
    n_tc = 2 if "v7" in kind else 1
    tiles = n_tc if (n_tc > 1 and B >= 256 * n_tc) else 1
    bb = _round_up(-(-B // tiles), 256)
    return min(bb, 2048)


@functools.partial(jax.jit, static_argnames=("block_b",))
def autoencoder_supervised_fwd(x, params, *, block_b=None):
    """AutoencoderSupervised forward as a Pallas TPU kernel.

    Args:
      x: [B, input_dim] float32.
      params: dict of f32 weights (pre-transposed to [in, out]) and biases [1, out].
      block_b: batch tile (multiple of 128). Default: auto-picked per device so
        small batches run as a single grid step (or an even 2-way split on v7x).
    Returns:
      (x_reconstructed [B, input_dim], fantasy_points [B, 1], z [B, latent_dim])
    """
    B, input_dim = x.shape
    hidden_dim = params["we1"].shape[1]
    latent_dim = params["we2"].shape[1]
    half_dim = params["ws1"].shape[1]

    if block_b is None:
        block_b = _pick_block_b(B)
    assert block_b % 128 == 0, "block_b must fill MXU M rows (multiple of 128)"

    # ---- pack / cast parameters for the kernel ----
    bf16 = jnp.bfloat16
    we1 = params["we1"].astype(bf16)
    we2 = params["we2"].astype(bf16)
    wd2 = params["wd2"].astype(bf16)
    wz = jnp.concatenate([params["wd1"], params["ws1"]], axis=1).astype(bf16)
    bz = jnp.concatenate([params["bd1"], params["bs1"]], axis=1)
    ws2_row = params["ws2"].T  # [1, half], stays f32 (VPU path)
    weight_args = [we1, params["be1"], we2, params["be2"],
                   wz, bz, wd2, params["bd2"], ws2_row, params["bs2"]]

    # ---- pad batch so the grid tiles evenly ----
    b_pad = _round_up(B, block_b)
    if b_pad != B:
        x = jnp.pad(x, ((0, b_pad - B), (0, 0)))
    grid = (b_pad // block_b,)

    packed_cols = input_dim + latent_dim + 1
    out_w = max(128, _round_up(packed_cols, 128))

    # Weights/biases: tiny (~60 KB total incl. double-buffering), full-array
    # blocks with a constant index map.
    # TODO(synk): could single-buffer / merge these 10 operands
    # (pipeline_mode=pl.Buffered(1) or one packed weight slab) to trim startup
    # DMA bookkeeping; left default-buffered for lowering safety.
    def full_spec(arr):
        return pl.BlockSpec(arr.shape, lambda i: (0, 0))

    in_specs = [pl.BlockSpec((block_b, input_dim), lambda i: (i, 0))]
    in_specs += [full_spec(a) for a in weight_args]
    out_specs = pl.BlockSpec((block_b, out_w), lambda i: (i, 0))
    out_shape = jax.ShapeDtypeStruct((b_pad, out_w), jnp.float32)

    flops = 2 * b_pad * (input_dim * hidden_dim + hidden_dim * latent_dim
                         + latent_dim * (hidden_dim + half_dim)
                         + hidden_dim * input_dim + half_dim)
    bytes_accessed = (int(x.size) * x.dtype.itemsize
                      + b_pad * out_w * 4
                      + sum(int(a.size) * a.dtype.itemsize for a in weight_args))
    cost = pl.CostEstimate(flops=int(flops), transcendentals=0,
                           bytes_accessed=int(bytes_accessed))

    packed = pl.pallas_call(
        _autoencoder_kernel,
        out_shape=out_shape,
        grid_spec=pltpu.PrefetchScalarGridSpec(
            num_scalar_prefetch=0,
            grid=grid,
            in_specs=in_specs,
            out_specs=out_specs,
        ),
        compiler_params=pltpu.CompilerParams(
            dimension_semantics=("parallel",),
        ),
        cost_estimate=cost,
    )(x, *weight_args)

    x_rec = packed[:B, :input_dim]
    z = packed[:B, input_dim:input_dim + latent_dim]
    fp = packed[:B, input_dim + latent_dim:input_dim + latent_dim + 1]
    return x_rec, fp, z


def init_params(key, input_dim, latent_dim, hidden_dim, dtype=jnp.float32):
    """Deterministic init matching nn.Linear shapes; weights stored as [in, out]."""
    half = latent_dim // 2

    def linear(key, fan_in, fan_out):
        kw, kb = jax.random.split(key)
        bound = 1.0 / jnp.sqrt(fan_in)
        w = jax.random.uniform(kw, (fan_in, fan_out), dtype, -bound, bound)
        b = jax.random.uniform(kb, (1, fan_out), dtype, -bound, bound)
        return w, b

    keys = jax.random.split(key, 6)
    we1, be1 = linear(keys[0], input_dim, hidden_dim)
    we2, be2 = linear(keys[1], hidden_dim, latent_dim)
    wd1, bd1 = linear(keys[2], latent_dim, hidden_dim)
    wd2, bd2 = linear(keys[3], hidden_dim, input_dim)
    ws1, bs1 = linear(keys[4], latent_dim, half)
    ws2, bs2 = linear(keys[5], half, 1)
    return dict(we1=we1, be1=be1, we2=we2, be2=be2,
                wd1=wd1, bd1=bd1, wd2=wd2, bd2=bd2,
                ws1=ws1, bs1=bs1, ws2=ws2, bs2=bs2)


def reference_fwd_f32(x, p):
    """Exact module semantics in f32 (loose sanity check vs. bf16 kernel)."""
    h = jnp.maximum(x @ p["we1"] + p["be1"], 0.0)
    z = h @ p["we2"] + p["be2"]
    hd = jnp.maximum(z @ p["wd1"] + p["bd1"], 0.0)
    x_rec = hd @ p["wd2"] + p["bd2"]
    hs = jnp.maximum(z @ p["ws1"] + p["bs1"], 0.0)
    fp = hs @ p["ws2"] + p["bs2"]
    return x_rec, fp, z


def reference_fwd_bf16(x, p):
    """Pure-JAX reference mirroring the kernel's bf16-operand / f32-accumulate math."""
    bf = lambda a: a.astype(jnp.bfloat16)
    dot = lambda a, b: jnp.dot(bf(a), bf(b), preferred_element_type=jnp.float32)
    h = jnp.maximum(dot(x, p["we1"]) + p["be1"], 0.0)
    z = dot(h, p["we2"]) + p["be2"]
    hd = jnp.maximum(dot(z, p["wd1"]) + p["bd1"], 0.0)
    x_rec = dot(hd, p["wd2"]) + p["bd2"]
    hs = jnp.maximum(dot(z, p["ws1"]) + p["bs1"], 0.0)
    fp = jnp.sum(hs * p["ws2"].T, axis=-1, keepdims=True) + p["bs2"]
    return x_rec, fp, z


if __name__ == "__main__":
    # Module-consistent feature dims: input_dim=32, hidden_dim=64, latent_dim=16
    # (latent_dim // 2 = 8).  Batch 512: auto tile -> one 512-row grid step on
    # v5e/v6e (single TC), or two 256-row steps on v7x (one per TensorCore).
    B, INPUT_DIM, LATENT_DIM, HIDDEN_DIM = 512, 32, 16, 64

    key = jax.random.PRNGKey(0)
    kx, kp = jax.random.split(key)
    x = jax.random.normal(kx, (B, INPUT_DIM), jnp.float32)
    params = init_params(kp, INPUT_DIM, LATENT_DIM, HIDDEN_DIM)

    x_rec, fp, z = autoencoder_supervised_fwd(x, params)
    jax.block_until_ready((x_rec, fp, z))

    assert x_rec.shape == (B, INPUT_DIM)
    assert fp.shape == (B, 1)
    assert z.shape == (B, LATENT_DIM)

    # Tight check vs. a reference using the same bf16-operand numerics.
    x_rec_b, fp_b, z_b = reference_fwd_bf16(x, params)
    assert jnp.allclose(x_rec, x_rec_b, atol=5e-3, rtol=5e-3), "x_reconstructed mismatch"
    assert jnp.allclose(fp, fp_b, atol=5e-3, rtol=5e-3), "fantasy_points mismatch"
    assert jnp.allclose(z, z_b, atol=5e-3, rtol=5e-3), "z mismatch"

    # Loose sanity check vs. the exact f32 module math (bf16 MXU rounding).
    x_rec_f, fp_f, z_f = reference_fwd_f32(x, params)
    assert jnp.allclose(x_rec, x_rec_f, atol=1e-1, rtol=1e-1), "x_reconstructed far from f32 ref"
    assert jnp.allclose(fp, fp_f, atol=1e-1, rtol=1e-1), "fantasy_points far from f32 ref"
    assert jnp.allclose(z, z_f, atol=1e-1, rtol=1e-1), "z far from f32 ref"

    print("KERNEL_OK")
</pallas_src>

<mosaic_0001>
module attributes {stable_mosaic.version = 11 : i64} {
  func.func @_autoencoder_kernel(%arg0: i32, %arg1: memref<512x32xf32, #tpu.memory_space<vmem>>, %arg2: memref<32x64xbf16, #tpu.memory_space<vmem>>, %arg3: memref<1x64xf32, #tpu.memory_space<vmem>>, %arg4: memref<64x16xbf16, #tpu.memory_space<vmem>>, %arg5: memref<1x16xf32, #tpu.memory_space<vmem>>, %arg6: memref<16x72xbf16, #tpu.memory_space<vmem>>, %arg7: memref<1x72xf32, #tpu.memory_space<vmem>>, %arg8: memref<64x32xbf16, #tpu.memory_space<vmem>>, %arg9: memref<1x32xf32, #tpu.memory_space<vmem>>, %arg10: memref<1x8xf32, #tpu.memory_space<vmem>>, %arg11: memref<1x1xf32, #tpu.memory_space<vmem>>, %arg12: memref<512x128xf32, #tpu.memory_space<vmem>>) attributes {dimension_semantics = [#tpu.dimension_semantics<parallel>], iteration_bounds = array<i64: 1>, scalar_prefetch = 0 : i64, scratch_operands = 0 : i64, tpu.core_type = #tpu.core_type<tc>, window_params = [{transform_indices = @transform_0, window_bounds = array<i64: 512, 32>}, {pipeline_mode = #tpu.pipeline_mode<synchronous>, transform_indices = @transform_1, window_bounds = array<i64: 32, 64>}, {pipeline_mode = #tpu.pipeline_mode<synchronous>, transform_indices = @transform_2, window_bounds = array<i64: 1, 64>}, {pipeline_mode = #tpu.pipeline_mode<synchronous>, transform_indices = @transform_3, window_bounds = array<i64: 64, 16>}, {pipeline_mode = #tpu.pipeline_mode<synchronous>, transform_indices = @transform_4, window_bounds = array<i64: 1, 16>}, {pipeline_mode = #tpu.pipeline_mode<synchronous>, transform_indices = @transform_5, window_bounds = array<i64: 16, 72>}, {pipeline_mode = #tpu.pipeline_mode<synchronous>, transform_indices = @transform_6, window_bounds = array<i64: 1, 72>}, {pipeline_mode = #tpu.pipeline_mode<synchronous>, transform_indices = @transform_7, window_bounds = array<i64: 64, 32>}, {pipeline_mode = #tpu.pipeline_mode<synchronous>, transform_indices = @transform_8, window_bounds = array<i64: 1, 32>}, {pipeline_mode = #tpu.pipeline_mode<synchronous>, transform_indices = @transform_9, window_bounds = array<i64: 1, 8>}, {pipeline_mode = #tpu.pipeline_mode<synchronous>, transform_indices = @transform_10, window_bounds = array<i64: 1, 1>}, {transform_indices = @transform_11, window_bounds = array<i64: 512, 128>}]} {
    %c0 = arith.constant 0 : index
    %c0_0 = arith.constant 0 : index
    %0 = vector.load %arg1[%c0, %c0_0] : memref<512x32xf32, #tpu.memory_space<vmem>>, vector<512x32xf32>
    %1 = arith.truncf %0 : vector<512x32xf32> to vector<512x32xbf16>
    %c0_1 = arith.constant 0 : index
    %c0_2 = arith.constant 0 : index
    %2 = vector.load %arg2[%c0_1, %c0_2] : memref<32x64xbf16, #tpu.memory_space<vmem>>, vector<32x64xbf16>
    %cst = arith.constant dense<0.000000e+00> : vector<512x64xf32>
    %3 = tpu.matmul %1, %2, %cst {dimension_numbers = #tpu.dot_dimension_numbers<[1], [0], [0], [1], [0, 0, 1, 1], [], []>} : vector<512x32xbf16>, vector<32x64xbf16>, vector<512x64xf32> -> vector<512x64xf32>
    %c0_3 = arith.constant 0 : index
    %c0_4 = arith.constant 0 : index
    %4 = vector.load %arg3[%c0_3, %c0_4] : memref<1x64xf32, #tpu.memory_space<vmem>>, vector<1x64xf32>
    %5 = vector.broadcast %4 : vector<1x64xf32> to vector<512x64xf32>
    %6 = arith.addf %3, %5 : vector<512x64xf32>
    %cst_5 = arith.constant 0.000000e+00 : f32
    %7 = vector.broadcast %cst_5 : f32 to vector<512x64xf32>
    %8 = arith.maximumf %6, %7 : vector<512x64xf32>
    %9 = arith.truncf %8 : vector<512x64xf32> to vector<512x64xbf16>
    %c0_6 = arith.constant 0 : index
    %c0_7 = arith.constant 0 : index
    %10 = vector.load %arg4[%c0_6, %c0_7] : memref<64x16xbf16, #tpu.memory_space<vmem>>, vector<64x16xbf16>
    %cst_8 = arith.constant dense<0.000000e+00> : vector<512x16xf32>
    %11 = tpu.matmul %9, %10, %cst_8 {dimension_numbers = #tpu.dot_dimension_numbers<[1], [0], [0], [1], [0, 0, 1, 1], [], []>} : vector<512x64xbf16>, vector<64x16xbf16>, vector<512x16xf32> -> vector<512x16xf32>
    %c0_9 = arith.constant 0 : index
    %c0_10 = arith.constant 0 : index
    %12 = vector.load %arg5[%c0_9, %c0_10] : memref<1x16xf32, #tpu.memory_space<vmem>>, vector<1x16xf32>
    %13 = vector.broadcast %12 : vector<1x16xf32> to vector<512x16xf32>
    %14 = arith.addf %11, %13 : vector<512x16xf32>
    %15 = arith.truncf %14 : vector<512x16xf32> to vector<512x16xbf16>
    %c0_11 = arith.constant 0 : index
    %c0_12 = arith.constant 0 : index
    %16 = vector.load %arg6[%c0_11, %c0_12] : memref<16x72xbf16, #tpu.memory_space<vmem>>, vector<16x72xbf16>
    %cst_13 = arith.constant dense<0.000000e+00> : vector<512x72xf32>
    %17 = tpu.matmul %15, %16, %cst_13 {dimension_numbers = #tpu.dot_dimension_numbers<[1], [0], [0], [1], [0, 0, 1, 1], [], []>} : vector<512x16xbf16>, vector<16x72xbf16>, vector<512x72xf32> -> vector<512x72xf32>
    %c0_14 = arith.constant 0 : index
    %c0_15 = arith.constant 0 : index
    %18 = vector.load %arg7[%c0_14, %c0_15] : memref<1x72xf32, #tpu.memory_space<vmem>>, vector<1x72xf32>
    %19 = vector.broadcast %18 : vector<1x72xf32> to vector<512x72xf32>
    %20 = arith.addf %17, %19 : vector<512x72xf32>
    %cst_16 = arith.constant 0.000000e+00 : f32
    %21 = vector.broadcast %cst_16 : f32 to vector<512x72xf32>
    %22 = arith.maximumf %20, %21 : vector<512x72xf32>
    %23 = vector.extract_strided_slice %22 {offsets = [0, 0], sizes = [512, 64], strides = [1, 1]} : vector<512x72xf32> to vector<512x64xf32>
    %24 = vector.extract_strided_slice %22 {offsets = [0, 64], sizes = [512, 8], strides = [1, 1]} : vector<512x72xf32> to vector<512x8xf32>
    %25 = arith.truncf %23 : vector<512x64xf32> to vector<512x64xbf16>
    %c0_17 = arith.constant 0 : index
    %c0_18 = arith.constant 0 : index
    %26 = vector.load %arg8[%c0_17, %c0_18] : memref<64x32xbf16, #tpu.memory_space<vmem>>, vector<64x32xbf16>
    %cst_19 = arith.constant dense<0.000000e+00> : vector<512x32xf32>
    %27 = tpu.matmul %25, %26, %cst_19 {dimension_numbers = #tpu.dot_dimension_numbers<[1], [0], [0], [1], [0, 0, 1, 1], [], []>} : vector<512x64xbf16>, vector<64x32xbf16>, vector<512x32xf32> -> vector<512x32xf32>
    %c0_20 = arith.constant 0 : index
    %c0_21 = arith.constant 0 : index
    %28 = vector.load %arg9[%c0_20, %c0_21] : memref<1x32xf32, #tpu.memory_space<vmem>>, vector<1x32xf32>
    %29 = vector.broadcast %28 : vector<1x32xf32> to vector<512x32xf32>
    %30 = arith.addf %27, %29 : vector<512x32xf32>
    %c0_22 = arith.constant 0 : index
    %c0_23 = arith.constant 0 : index
    %31 = vector.load %arg10[%c0_22, %c0_23] : memref<1x8xf32, #tpu.memory_space<vmem>>, vector<1x8xf32>
    %32 = vector.broadcast %31 : vector<1x8xf32> to vector<512x8xf32>
    %33 = arith.mulf %24, %32 : vector<512x8xf32>
    %cst_24 = arith.constant dense<0.000000e+00> : vector<512xf32>
    %34 = vector.multi_reduction <add>, %33, %cst_24 [1] : vector<512x8xf32> to vector<512xf32>
    %35 = vector.shape_cast %34 : vector<512xf32> to vector<512x1xf32>
    %c0_25 = arith.constant 0 : index
    %c0_26 = arith.constant 0 : index
    %36 = vector.load %arg11[%c0_25, %c0_26] : memref<1x1xf32, #tpu.memory_space<vmem>>, vector<1x1xf32>
    %37 = vector.broadcast %36 : vector<1x1xf32> to vector<512x1xf32>
    %38 = arith.addf %35, %37 : vector<512x1xf32>
    %cst_27 = arith.constant 0.000000e+00 : f32
    %39 = vector.broadcast %cst_27 : f32 to vector<512x79xf32>
    %40 = tpu.concatenate %30, %14, %38, %39 in 1 : vector<512x32xf32>, vector<512x16xf32>, vector<512x1xf32>, vector<512x79xf32> -> vector<512x128xf32>
    %c0_28 = arith.constant 0 : index
    %c0_29 = arith.constant 0 : index
    %41 = vector.load %arg12[%c0_28, %c0_29] : memref<512x128xf32, #tpu.memory_space<vmem>>, vector<512x128xf32>
    tpu.vector_store %arg12[%c0_28, %c0_29], %40 {strides = array<i32>} : memref<512x128xf32, #tpu.memory_space<vmem>>, vector<512x128xf32>,
    return
  }
  func.func @transform_0(%arg0: i32) -> (i32, i32) {
    %c0_i32 = arith.constant 0 : i32
    %c0_i32_0 = arith.constant 0 : i32
    return %arg0, %c0_i32 : i32, i32
  }
  func.func @transform_1(%arg0: i32) -> (i32, i32) {
    %c0_i32 = arith.constant 0 : i32
    %c0_i32_0 = arith.constant 0 : i32
    %c0_i32_1 = arith.constant 0 : i32
    return %c0_i32, %c0_i32_0 : i32, i32
  }
  func.func @transform_2(%arg0: i32) -> (i32, i32) {
    %c0_i32 = arith.constant 0 : i32
    %c0_i32_0 = arith.constant 0 : i32
    %c0_i32_1 = arith.constant 0 : i32
    return %c0_i32, %c0_i32_0 : i32, i32
  }
  func.func @transform_3(%arg0: i32) -> (i32, i32) {
    %c0_i32 = arith.constant 0 : i32
    %c0_i32_0 = arith.constant 0 : i32
    %c0_i32_1 = arith.constant 0 : i32
    return %c0_i32, %c0_i32_0 : i32, i32
  }
  func.func @transform_4(%arg0: i32) -> (i32, i32) {
    %c0_i32 = arith.constant 0 : i32
    %c0_i32_0 = arith.constant 0 : i32
    %c0_i32_1 = arith.constant 0 : i32
    return %c0_i32, %c0_i32_0 : i32, i32
  }
  func.func @transform_5(%arg0: i32) -> (i32, i32) {
    %c0_i32 = arith.constant 0 : i32
    %c0_i32_0 = arith.constant 0 : i32
    %c0_i32_1 = arith.constant 0 : i32
    return %c0_i32, %c0_i32_0 : i32, i32
  }
  func.func @transform_6(%arg0: i32) -> (i32, i32) {
    %c0_i32 = arith.constant 0 : i32
    %c0_i32_0 = arith.constant 0 : i32
    %c0_i32_1 = arith.constant 0 : i32
    return %c0_i32, %c0_i32_0 : i32, i32
  }
  func.func @transform_7(%arg0: i32) -> (i32, i32) {
    %c0_i32 = arith.constant 0 : i32
    %c0_i32_0 = arith.constant 0 : i32
    %c0_i32_1 = arith.constant 0 : i32
    return %c0_i32, %c0_i32_0 : i32, i32
  }
  func.func @transform_8(%arg0: i32) -> (i32, i32) {
    %c0_i32 = arith.constant 0 : i32
    %c0_i32_0 = arith.constant 0 : i32
    %c0_i32_1 = arith.constant 0 : i32
    return %c0_i32, %c0_i32_0 : i32, i32
  }
  func.func @transform_9(%arg0: i32) -> (i32, i32) {
    %c0_i32 = arith.constant 0 : i32
    %c0_i32_0 = arith.constant 0 : i32
    %c0_i32_1 = arith.constant 0 : i32
    return %c0_i32, %c0_i32_0 : i32, i32
  }
  func.func @transform_10(%arg0: i32) -> (i32, i32) {
    %c0_i32 = arith.constant 0 : i32
    %c0_i32_0 = arith.constant 0 : i32
    %c0_i32_1 = arith.constant 0 : i32
    return %c0_i32, %c0_i32_0 : i32, i32
  }
  func.func @transform_11(%arg0: i32) -> (i32, i32) {
    %c0_i32 = arith.constant 0 : i32
    %c0_i32_0 = arith.constant 0 : i32
    return %arg0, %c0_i32 : i32, i32
  }
}

</mosaic_0001>

<llo_original>
// kernel: autoencoder_supervised_fwd.1
$region0: #{autoencoder_supervised_fwd.1}
  #allocation0 [shape = 'u32[]', space=smem, size = 0x4, offset = 0x4, fixed_abs, tag = 'smem constant byte address 0x4 - core index']
  #allocation1 [shape = 'u32[144,128]{1,0:T(1,128)}', space=vmem, size = 0x12000, scoped, tag = 'internal scratch']
  #allocation2 [shape = 'f32[1,1]{1,0:T(1,128)S(1)}', space=vmem, size = 0x200, scoped, tag = 'scoped memory for autoencoder_supervised_fwd.1']
  %s0 = inlined_call_operand.vmem [shape: f32[512,32], index: 0, kind: input, shape index: {}]
  %s1 = inlined_call_operand.vmem [shape: bf16[32,64], index: 1, kind: input, shape index: {}]
  %s2 = inlined_call_operand.vmem [shape: f32[1,64], index: 2, kind: input, shape index: {}]
  %s3 = inlined_call_operand.vmem [shape: bf16[64,16], index: 3, kind: input, shape index: {}]
  %s4 = inlined_call_operand.vmem [shape: f32[1,16], index: 4, kind: input, shape index: {}]
  %s5 = inlined_call_operand.vmem [shape: bf16[16,72], index: 5, kind: input, shape index: {}]
  %s6 = inlined_call_operand.vmem [shape: f32[1,72], index: 6, kind: input, shape index: {}]
  %s7 = inlined_call_operand.vmem [shape: bf16[64,32], index: 7, kind: input, shape index: {}]
  %s8 = inlined_call_operand.vmem [shape: f32[1,32], index: 8, kind: input, shape index: {}]
  %s9 = inlined_call_operand.vmem [shape: f32[1,8], index: 9, kind: input, shape index: {}]
  %s10 = inlined_call_operand.<no memory space> [shape: f32[1,1], index: 10, kind: input, shape index: {}]
  %s11 = inlined_call_operand.vmem [shape: f32[512,128], index: 11, kind: output, shape index: {}]
  %s12 = sld [smem:[#allocation0]]
  $region54: #{autoencoder_supervised_fwd.1} parent=0
    _
  %s14 = ssub.s32 1, %s12
  %s15 = scalar_select 0, %s14, %s12
  %v16 = vstv %s10
  %17 = vst [vmem:[#allocation2] sm:$0x1] %v16
  // Predicated region
  $region2: #{autoencoder_supervised_fwd.1} parent=0 // pred_check
    _
  $region3: #{autoencoder_supervised_fwd.1} parent=0 // pred_check_branch
    %19 = sbr.rel (0) target = $region5
  $region4: #{autoencoder_supervised_fwd.1} parent=0 // pred_region
    _
  $region5: #{autoencoder_supervised_fwd.1} parent=0 // pred_fallthru
    _
  // Predicated region
  $region6: #{autoencoder_supervised_fwd.1} parent=0 // pred_check
    _
  $region7: #{autoencoder_supervised_fwd.1} parent=0 // pred_check_branch
    %21 = sbr.rel (0) target = $region9
  $region8: #{autoencoder_supervised_fwd.1} parent=0 // pred_region
    _
  $region9: #{autoencoder_supervised_fwd.1} parent=0 // pred_fallthru
    _
  // Predicated region
  $region10: #{autoencoder_supervised_fwd.1} parent=0 // pred_check
    _
  $region11: #{autoencoder_supervised_fwd.1} parent=0 // pred_check_branch
    %23 = sbr.rel (0) target = $region13
  $region12: #{autoencoder_supervised_fwd.1} parent=0 // pred_region
    _
  $region13: #{autoencoder_supervised_fwd.1} parent=0 // pred_fallthru
    _
  // Predicated region
  $region14: #{autoencoder_supervised_fwd.1} parent=0 // pred_check
    _
  $region15: #{autoencoder_supervised_fwd.1} parent=0 // pred_check_branch
    %25 = sbr.rel (0) target = $region17
  $region16: #{autoencoder_supervised_fwd.1} parent=0 // pred_region
    _
  $region17: #{autoencoder_supervised_fwd.1} parent=0 // pred_fallthru
    _
  // Predicated region
  $region18: #{autoencoder_supervised_fwd.1} parent=0 // pred_check
    _
  $region19: #{autoencoder_supervised_fwd.1} parent=0 // pred_check_branch
    %27 = sbr.rel (0) target = $region21
  $region20: #{autoencoder_supervised_fwd.1} parent=0 // pred_region
    _
  $region21: #{autoencoder_supervised_fwd.1} parent=0 // pred_fallthru
    _
  // Predicated region
  $region22: #{autoencoder_supervised_fwd.1} parent=0 // pred_check
    _
  $region23: #{autoencoder_supervised_fwd.1} parent=0 // pred_check_branch
    %29 = sbr.rel (0) target = $region25
  $region24: #{autoencoder_supervised_fwd.1} parent=0 // pred_region
    _
  $region25: #{autoencoder_supervised_fwd.1} parent=0 // pred_fallthru
    _
  // Predicated region
  $region26: #{autoencoder_supervised_fwd.1} parent=0 // pred_check
    _
  $region27: #{autoencoder_supervised_fwd.1} parent=0 // pred_check_branch
    %31 = sbr.rel (0) target = $region29
  $region28: #{autoencoder_supervised_fwd.1} parent=0 // pred_region
    _
  $region29: #{autoencoder_supervised_fwd.1} parent=0 // pred_fallthru
    _
  // Predicated region
  $region30: #{autoencoder_supervised_fwd.1} parent=0 // pred_check
    _
  $region31: #{autoencoder_supervised_fwd.1} parent=0 // pred_check_branch
    %33 = sbr.rel (0) target = $region33
  $region32: #{autoencoder_supervised_fwd.1} parent=0 // pred_region
    _
  $region33: #{autoencoder_supervised_fwd.1} parent=0 // pred_fallthru
    _
  // Predicated region
  $region34: #{autoencoder_supervised_fwd.1} parent=0 // pred_check
    _
  $region35: #{autoencoder_supervised_fwd.1} parent=0 // pred_check_branch
    %35 = sbr.rel (0) target = $region37
  $region36: #{autoencoder_supervised_fwd.1} parent=0 // pred_region
    _
  $region37: #{autoencoder_supervised_fwd.1} parent=0 // pred_fallthru
    _
  // Predicated region
  $region38: #{autoencoder_supervised_fwd.1} parent=0 // pred_check
    _
  $region39: #{autoencoder_supervised_fwd.1} parent=0 // pred_check_branch
    %37 = sbr.rel (0) target = $region41
  $region40: #{autoencoder_supervised_fwd.1} parent=0 // pred_region
    _
  $region41: #{autoencoder_supervised_fwd.1} parent=0 // pred_fallthru
    _
  // Predicated region
  $region42: #{autoencoder_supervised_fwd.1} parent=0 // pred_check
    _
  $region43: #{autoencoder_supervised_fwd.1} parent=0 // pred_check_branch
    %39 = sbr.rel (0) target = $region45
  $region44: #{autoencoder_supervised_fwd.1} parent=0 // pred_region
    _
  $region45: #{autoencoder_supervised_fwd.1} parent=0 // pred_fallthru
    _
  %v41 = vld [vmem:[%s0] sm:$0xff]
  %v42 = vld [vmem:[%s0 + $0x8] sm:$0xff]
  %v43 = vld [vmem:[%s0 + $0x10] sm:$0xff]
  %v44 = vld [vmem:[%s0 + $0x18] sm:$0xff]
  %v45 = vld [vmem:[%s0 + $0x20] sm:$0xff]
  %v46 = vld [vmem:[%s0 + $0x28] sm:$0xff]
  %v47 = vld [vmem:[%s0 + $0x30] sm:$0xff]
  %v48 = vld [vmem:[%s0 + $0x38] sm:$0xff]
  %v49 = vld [vmem:[%s0 + $0x40] sm:$0xff]
  %v50 = vld [vmem:[%s0 + $0x48] sm:$0xff]
  %v51 = vld [vmem:[%s0 + $0x50] sm:$0xff]
  %v52 = vld [vmem:[%s0 + $0x58] sm:$0xff]
  %v53 = vld [vmem:[%s0 + $0x60] sm:$0xff]
  %v54 = vld [vmem:[%s0 + $0x68] sm:$0xff]
  %v55 = vld [vmem:[%s0 + $0x70] sm:$0xff]
  %v56 = vld [vmem:[%s0 + $0x78] sm:$0xff]
  %v57 = vld [vmem:[%s0 + $0x80] sm:$0xff]
  %v58 = vld [vmem:[%s0 + $0x88] sm:$0xff]
  %v59 = vld [vmem:[%s0 + $0x90] sm:$0xff]
  %v60 = vld [vmem:[%s0 + $0x98] sm:$0xff]
  %v61 = vld [vmem:[%s0 + $0xa0] sm:$0xff]
  %v62 = vld [vmem:[%s0 + $0xa8] sm:$0xff]
  %v63 = vld [vmem:[%s0 + $0xb0] sm:$0xff]
  %v64 = vld [vmem:[%s0 + $0xb8] sm:$0xff]
  %v65 = vld [vmem:[%s0 + $0xc0] sm:$0xff]
  %v66 = vld [vmem:[%s0 + $0xc8] sm:$0xff]
  %v67 = vld [vmem:[%s0 + $0xd0] sm:$0xff]
  %v68 = vld [vmem:[%s0 + $0xd8] sm:$0xff]
  %v69 = vld [vmem:[%s0 + $0xe0] sm:$0xff]
  %v70 = vld [vmem:[%s0 + $0xe8] sm:$0xff]
  %v71 = vld [vmem:[%s0 + $0xf0] sm:$0xff]
  %v72 = vld [vmem:[%s0 + $0xf8] sm:$0xff]
  %v73 = vld [vmem:[%s0 + $0x100] sm:$0xff]
  %v74 = vld [vmem:[%s0 + $0x108] sm:$0xff]
  %v75 = vld [vmem:[%s0 + $0x110] sm:$0xff]
  %v76 = vld [vmem:[%s0 + $0x118] sm:$0xff]
  %v77 = vld [vmem:[%s0 + $0x120] sm:$0xff]
  %v78 = vld [vmem:[%s0 + $0x128] sm:$0xff]
  %v79 = vld [vmem:[%s0 + $0x130] sm:$0xff]
  %v80 = vld [vmem:[%s0 + $0x138] sm:$0xff]
  %v81 = vld [vmem:[%s0 + $0x140] sm:$0xff]
  %v82 = vld [vmem:[%s0 + $0x148] sm:$0xff]
  %v83 = vld [vmem:[%s0 + $0x150] sm:$0xff]
  %v84 = vld [vmem:[%s0 + $0x158] sm:$0xff]
  %v85 = vld [vmem:[%s0 + $0x160] sm:$0xff]
  %v86 = vld [vmem:[%s0 + $0x168] sm:$0xff]
  %v87 = vld [vmem:[%s0 + $0x170] sm:$0xff]
  %v88 = vld [vmem:[%s0 + $0x178] sm:$0xff]
  %v89 = vld [vmem:[%s0 + $0x180] sm:$0xff]
  %v90 = vld [vmem:[%s0 + $0x188] sm:$0xff]
  %v91 = vld [vmem:[%s0 + $0x190] sm:$0xff]
  %v92 = vld [vmem:[%s0 + $0x198] sm:$0xff]
  %v93 = vld [vmem:[%s0 + $0x1a0] sm:$0xff]
  %v94 = vld [vmem:[%s0 + $0x1a8] sm:$0xff]
  %v95 = vld [vmem:[%s0 + $0x1b0] sm:$0xff]
  %v96 = vld [vmem:[%s0 + $0x1b8] sm:$0xff]
  %v97 = vld [vmem:[%s0 + $0x1c0] sm:$0xff]
  %v98 = vld [vmem:[%s0 + $0x1c8] sm:$0xff]
  %v99 = vld [vmem:[%s0 + $0x1d0] sm:$0xff]
  %v100 = vld [vmem:[%s0 + $0x1d8] sm:$0xff]
  %v101 = vld [vmem:[%s0 + $0x1e0] sm:$0xff]
  %v102 = vld [vmem:[%s0 + $0x1e8] sm:$0xff]
  %v103 = vld [vmem:[%s0 + $0x1f0] sm:$0xff]
  %v104 = vld [vmem:[%s0 + $0x1f8] sm:$0xff]
  %v105 = vpack.c.bf16 %v42, %v41
  %v106 = vpack.c.bf16 %v44, %v43
  %v107 = vpack.c.bf16 %v46, %v45
  %v108 = vpack.c.bf16 %v48, %v47
  %v109 = vpack.c.bf16 %v50, %v49
  %v110 = vpack.c.bf16 %v52, %v51
  %v111 = vpack.c.bf16 %v54, %v53
  %v112 = vpack.c.bf16 %v56, %v55
  %v113 = vpack.c.bf16 %v58, %v57
  %v114 = vpack.c.bf16 %v60, %v59
  %v115 = vpack.c.bf16 %v62, %v61
  %v116 = vpack.c.bf16 %v64, %v63
  %v117 = vpack.c.bf16 %v66, %v65
  %v118 = vpack.c.bf16 %v68, %v67
  %v119 = vpack.c.bf16 %v70, %v69
  %v120 = vpack.c.bf16 %v72, %v71
  %v121 = vpack.c.bf16 %v74, %v73
  %v122 = vpack.c.bf16 %v76, %v75
  %v123 = vpack.c.bf16 %v78, %v77
  %v124 = vpack.c.bf16 %v80, %v79
  %v125 = vpack.c.bf16 %v82, %v81
  %v126 = vpack.c.bf16 %v84, %v83
  %v127 = vpack.c.bf16 %v86, %v85
  %v128 = vpack.c.bf16 %v88, %v87
  %v129 = vpack.c.bf16 %v90, %v89
  %v130 = vpack.c.bf16 %v92, %v91
  %v131 = vpack.c.bf16 %v94, %v93
  %v132 = vpack.c.bf16 %v96, %v95
  %v133 = vpack.c.bf16 %v98, %v97
  %v134 = vpack.c.bf16 %v100, %v99
  %v135 = vpack.c.bf16 %v102, %v101
  %v136 = vpack.c.bf16 %v104, %v103
  %v137 = vld [vmem:[%s1] sm:$0xf]
  %v138 = vld [vmem:[%s1 + $0x4] sm:$0xf]
  %v139 = vld [vmem:[%s1 + $0x8] sm:$0xf]
  %v140 = vld [vmem:[%s1 + $0xc] sm:$0xf]
  %v141 = vld [vmem:[%s2] sm:$0x1]
  %v143 = vlaneseq
  %v144 = vshrl.u32 %v143, 7
  %v145 = vsub.s32 0, %v144
  %v146 = vrot.slane %v141, %v145
  %v152 = vunpack.c.l.b16 %v137
  %v153 = vunpack.c.l.b16 %v138
  %v154 = vunpack.c.l.b16 %v139
  %v155 = vunpack.c.l.b16 %v140
  %v156 = vpack.c.b16 %v153, %v152
  %v157 = vpack.c.b16 %v155, %v154
  %vm160 = vcmask 261120
  %v162 = vsel %vm160, %v105, 0
  %v165 = vsel %vm160, %v106, 0
  %v168 = vsel %vm160, %v107, 0
  %v171 = vsel %vm160, %v108, 0
  %v174 = vsel %vm160, %v109, 0
  %v177 = vsel %vm160, %v110, 0
  %v180 = vsel %vm160, %v111, 0
  %v183 = vsel %vm160, %v112, 0
  %v186 = vsel %vm160, %v113, 0
  %v189 = vsel %vm160, %v114, 0
  %v192 = vsel %vm160, %v115, 0
  %v195 = vsel %vm160, %v116, 0
  %v198 = vsel %vm160, %v117, 0
  %v201 = vsel %vm160, %v118, 0
  %v204 = vsel %vm160, %v119, 0
  %v207 = vsel %vm160, %v120, 0
  %v210 = vsel %vm160, %v121, 0
  %v213 = vsel %vm160, %v122, 0
  %v216 = vsel %vm160, %v123, 0
  %v219 = vsel %vm160, %v124, 0
  %v222 = vsel %vm160, %v125, 0
  %v225 = vsel %vm160, %v126, 0
  %v228 = vsel %vm160, %v127, 0
  %v231 = vsel %vm160, %v128, 0
  %v234 = vsel %vm160, %v129, 0
  %v237 = vsel %vm160, %v130, 0
  %v240 = vsel %vm160, %v131, 0
  %v243 = vsel %vm160, %v132, 0
  %v246 = vsel %vm160, %v133, 0
  %v249 = vsel %vm160, %v134, 0
  %v252 = vsel %vm160, %v135, 0
  %v255 = vsel %vm160, %v136, 0
  %257 = vmatprep.subr.bf16.mxu0 0
  %258 = vmatpush1.bf16.msra.mxu0 0
  %259 = vmatprep.subr.bf16.mxu0 0
  %260 = vmatpush1.bf16.msra.mxu0 0
  %261 = vmatprep.subr.bf16.mxu0 0
  %262 = vmatpush1.bf16.msra.mxu0 0
  %263 = vmatprep.subr.bf16.mxu0 0
  %264 = vmatpush1.bf16.msra.mxu0 0
  %265 = vmatprep.subr.bf16.mxu0 0
  %266 = vmatpush1.bf16.msra.mxu0 0
  %267 = vmatprep.subr.bf16.mxu0 0
  %268 = vmatpush1.bf16.msra.mxu0 0
  %269 = vmatprep.subr.bf16.mxu0 0
  %270 = vmatpush1.bf16.msra.mxu0 %v157
  %271 = vmatprep.subr.bf16.mxu0 0
  %272 = vmatpush1.bf16.msra.mxu0 %v156
  %273 = vmatprep.subr.bf16.mxu0 0
  %274 = vmatpush2.bf16.msra.mxu0 0
  %275 = vmatprep.subr.bf16.mxu0 0
  %276 = vmatpush2.bf16.msra.mxu0 0
  %277 = vmatprep.subr.bf16.mxu0 0
  %278 = vmatpush2.bf16.msra.mxu0 0
  %279 = vmatprep.subr.bf16.mxu0 0
  %280 = vmatpush2.bf16.msra.mxu0 0
  %281 = vmatprep.subr.bf16.mxu0 0
  %282 = vmatpush2.bf16.msra.mxu0 0
  %283 = vmatprep.subr.bf16.mxu0 0
  %284 = vmatpush2.bf16.msra.mxu0 0
  %285 = vmatprep.subr.bf16.mxu0 0
  %286 = vmatpush2.bf16.msra.mxu0 0
  %287 = vmatprep.subr.bf16.mxu0 0
  %288 = vmatpush2.bf16.msra.mxu0 0
  %289 = vmatprep.mubr.bf16.mxu0 0
  %290 = vmatmul.mubr.bf16.gmra.mxu0 %v162
  %v291 = vpop.f32.mrf.mxu0
  %v292 = vadd.f32 %v146, %v291
  %v293 = vpop.f32.mrf.mxu0
  %v294 = vpop.f32.mrf.mxu0
  %v295 = vadd.f32 %v146, %v294
  %v296 = vpop.f32.mrf.mxu0
  %297 = vmatprep.mubr.bf16.mxu0 0
  %298 = vmatmul.mubr.bf16.gmra.mxu0 %v165
  %v299 = vpop.f32.mrf.mxu0
  %v300 = vadd.f32 %v146, %v299
  %v301 = vpop.f32.mrf.mxu0
  %v302 = vpop.f32.mrf.mxu0
  %v303 = vadd.f32 %v146, %v302
  %v304 = vpop.f32.mrf.mxu0
  %305 = vmatprep.mubr.bf16.mxu0 0
  %306 = vmatmul.mubr.bf16.gmra.mxu0 %v168
  %v307 = vpop.f32.mrf.mxu0
  %v308 = vadd.f32 %v146, %v307
  %v309 = vpop.f32.mrf.mxu0
  %v310 = vpop.f32.mrf.mxu0
  %v311 = vadd.f32 %v146, %v310
  %v312 = vpop.f32.mrf.mxu0
  %313 = vmatprep.mubr.bf16.mxu0 0
  %314 = vmatmul.mubr.bf16.gmra.mxu0 %v171
  %v315 = vpop.f32.mrf.mxu0
  %v316 = vadd.f32 %v146, %v315
  %v317 = vpop.f32.mrf.mxu0
  %v318 = vpop.f32.mrf.mxu0
  %v319 = vadd.f32 %v146, %v318
  %v320 = vpop.f32.mrf.mxu0
  %321 = vmatprep.mubr.bf16.mxu0 0
  %322 = vmatmul.mubr.bf16.gmra.mxu0 %v174
  %v323 = vpop.f32.mrf.mxu0
  %v324 = vadd.f32 %v146, %v323
  %v325 = vpop.f32.mrf.mxu0
  %v326 = vpop.f32.mrf.mxu0
  %v327 = vadd.f32 %v146, %v326
  %v328 = vpop.f32.mrf.mxu0
  %329 = vmatprep.mubr.bf16.mxu0 0
  %330 = vmatmul.mubr.bf16.gmra.mxu0 %v177
  %v331 = vpop.f32.mrf.mxu0
  %v332 = vadd.f32 %v146, %v331
  %v333 = vpop.f32.mrf.mxu0
  %v334 = vpop.f32.mrf.mxu0
  %v335 = vadd.f32 %v146, %v334
  %v336 = vpop.f32.mrf.mxu0
  %337 = vmatprep.mubr.bf16.mxu0 0
  %338 = vmatmul.mubr.bf16.gmra.mxu0 %v180
  %v339 = vpop.f32.mrf.mxu0
  %v340 = vadd.f32 %v146, %v339
  %v341 = vpop.f32.mrf.mxu0
  %v342 = vpop.f32.mrf.mxu0
  %v343 = vadd.f32 %v146, %v342
  %v344 = vpop.f32.mrf.mxu0
  %345 = vmatprep.mubr.bf16.mxu0 0
  %346 = vmatmul.mubr.bf16.gmra.mxu0 %v183
  %v347 = vpop.f32.mrf.mxu0
  %v348 = vadd.f32 %v146, %v347
  %v349 = vpop.f32.mrf.mxu0
  %v350 = vpop.f32.mrf.mxu0
  %v351 = vadd.f32 %v146, %v350
  %v352 = vpop.f32.mrf.mxu0
  %353 = vmatprep.mubr.bf16.mxu0 0
  %354 = vmatmul.mubr.bf16.gmra.mxu0 %v186
  %v355 = vpop.f32.mrf.mxu0
  %v356 = vadd.f32 %v146, %v355
  %v357 = vpop.f32.mrf.mxu0
  %v358 = vpop.f32.mrf.mxu0
  %v359 = vadd.f32 %v146, %v358
  %v360 = vpop.f32.mrf.mxu0
  %361 = vmatprep.mubr.bf16.mxu0 0
  %362 = vmatmul.mubr.bf16.gmra.mxu0 %v189
  %v363 = vpop.f32.mrf.mxu0
  %v364 = vadd.f32 %v146, %v363
  %v365 = vpop.f32.mrf.mxu0
  %v366 = vpop.f32.mrf.mxu0
  %v367 = vadd.f32 %v146, %v366
  %v368 = vpop.f32.mrf.mxu0
  %369 = vmatprep.mubr.bf16.mxu0 0
  %370 = vmatmul.mubr.bf16.gmra.mxu0 %v192
  %v371 = vpop.f32.mrf.mxu0
  %v372 = vadd.f32 %v146, %v371
  %v373 = vpop.f32.mrf.mxu0
  %v374 = vpop.f32.mrf.mxu0
  %v375 = vadd.f32 %v146, %v374
  %v376 = vpop.f32.mrf.mxu0
  %377 = vmatprep.mubr.bf16.mxu0 0
  %378 = vmatmul.mubr.bf16.gmra.mxu0 %v195
  %v379 = vpop.f32.mrf.mxu0
  %v380 = vadd.f32 %v146, %v379
  %v381 = vpop.f32.mrf.mxu0
  %v382 = vpop.f32.mrf.mxu0
  %v383 = vadd.f32 %v146, %v382
  %v384 = vpop.f32.mrf.mxu0
  %385 = vmatprep.mubr.bf16.mxu0 0
  %386 = vmatmul.mubr.bf16.gmra.mxu0 %v198
  %v387 = vpop.f32.mrf.mxu0
  %v388 = vadd.f32 %v146, %v387
  %v389 = vpop.f32.mrf.mxu0
  %v390 = vpop.f32.mrf.mxu0
  %v391 = vadd.f32 %v146, %v390
  %v392 = vpop.f32.mrf.mxu0
  %393 = vmatprep.mubr.bf16.mxu0 0
  %394 = vmatmul.mubr.bf16.gmra.mxu0 %v201
  %v395 = vpop.f32.mrf.mxu0
  %v396 = vadd.f32 %v146, %v395
  %v397 = vpop.f32.mrf.mxu0
  %v398 = vpop.f32.mrf.mxu0
  %v399 = vadd.f32 %v146, %v398
  %v400 = vpop.f32.mrf.mxu0
  %401 = vmatprep.mubr.bf16.mxu0 0
  %402 = vmatmul.mubr.bf16.gmra.mxu0 %v204
  %v403 = vpop.f32.mrf.mxu0
  %v404 = vadd.f32 %v146, %v403
  %v405 = vpop.f32.mrf.mxu0
  %v406 = vpop.f32.mrf.mxu0
  %v407 = vadd.f32 %v146, %v406
  %v408 = vpop.f32.mrf.mxu0
  %409 = vmatprep.mubr.bf16.mxu0 0
  %410 = vmatmul.mubr.bf16.gmra.mxu0 %v207
  %v411 = vpop.f32.mrf.mxu0
  %v412 = vadd.f32 %v146, %v411
  %v413 = vpop.f32.mrf.mxu0
  %v414 = vpop.f32.mrf.mxu0
  %v415 = vadd.f32 %v146, %v414
  %v416 = vpop.f32.mrf.mxu0
  %417 = vmatprep.mubr.bf16.mxu0 0
  %418 = vmatmul.mubr.bf16.gmra.mxu0 %v210
  %v419 = vpop.f32.mrf.mxu0
  %v420 = vadd.f32 %v146, %v419
  %v421 = vpop.f32.mrf.mxu0
  %v422 = vpop.f32.mrf.mxu0
  %v423 = vadd.f32 %v146, %v422
  %v424 = vpop.f32.mrf.mxu0
  %425 = vmatprep.mubr.bf16.mxu0 0
  %426 = vmatmul.mubr.bf16.gmra.mxu0 %v213
  %v427 = vpop.f32.mrf.mxu0
  %v428 = vadd.f32 %v146, %v427
  %v429 = vpop.f32.mrf.mxu0
  %v430 = vpop.f32.mrf.mxu0
  %v431 = vadd.f32 %v146, %v430
  %v432 = vpop.f32.mrf.mxu0
  %433 = vmatprep.mubr.bf16.mxu0 0
  %434 = vmatmul.mubr.bf16.gmra.mxu0 %v216
  %v435 = vpop.f32.mrf.mxu0
  %v436 = vadd.f32 %v146, %v435
  %v437 = vpop.f32.mrf.mxu0
  %v438 = vpop.f32.mrf.mxu0
  %v439 = vadd.f32 %v146, %v438
  %v440 = vpop.f32.mrf.mxu0
  %441 = vmatprep.mubr.bf16.mxu0 0
  %442 = vmatmul.mubr.bf16.gmra.mxu0 %v219
  %v443 = vpop.f32.mrf.mxu0
  %v444 = vadd.f32 %v146, %v443
  %v445 = vpop.f32.mrf.mxu0
  %v446 = vpop.f32.mrf.mxu0
  %v447 = vadd.f32 %v146, %v446
  %v448 = vpop.f32.mrf.mxu0
  %449 = vmatprep.mubr.bf16.mxu0 0
  %450 = vmatmul.mubr.bf16.gmra.mxu0 %v222
  %v451 = vpop.f32.mrf.mxu0
  %v452 = vadd.f32 %v146, %v451
  %v453 = vpop.f32.mrf.mxu0
  %v454 = vpop.f32.mrf.mxu0
  %v455 = vadd.f32 %v146, %v454
  %v456 = vpop.f32.mrf.mxu0
  %457 = vmatprep.mubr.bf16.mxu0 0
  %458 = vmatmul.mubr.bf16.gmra.mxu0 %v225
  %v459 = vpop.f32.mrf.mxu0
  %v460 = vadd.f32 %v146, %v459
  %v461 = vpop.f32.mrf.mxu0
  %v462 = vpop.f32.mrf.mxu0
  %v463 = vadd.f32 %v146, %v462
  %v464 = vpop.f32.mrf.mxu0
  %465 = vmatprep.mubr.bf16.mxu0 0
  %466 = vmatmul.mubr.bf16.gmra.mxu0 %v228
  %v467 = vpop.f32.mrf.mxu0
  %v468 = vadd.f32 %v146, %v467
  %v469 = vpop.f32.mrf.mxu0
  %v470 = vpop.f32.mrf.mxu0
  %v471 = vadd.f32 %v146, %v470
  %v472 = vpop.f32.mrf.mxu0
  %473 = vmatprep.mubr.bf16.mxu0 0
  %474 = vmatmul.mubr.bf16.gmra.mxu0 %v231
  %v475 = vpop.f32.mrf.mxu0
  %v476 = vadd.f32 %v146, %v475
  %v477 = vpop.f32.mrf.mxu0
  %v478 = vpop.f32.mrf.mxu0
  %v479 = vadd.f32 %v146, %v478
  %v480 = vpop.f32.mrf.mxu0
  %481 = vmatprep.mubr.bf16.mxu0 0
  %482 = vmatmul.mubr.bf16.gmra.mxu0 %v234
  %v483 = vpop.f32.mrf.mxu0
  %v484 = vadd.f32 %v146, %v483
  %v485 = vpop.f32.mrf.mxu0
  %v486 = vpop.f32.mrf.mxu0
  %v487 = vadd.f32 %v146, %v486
  %v488 = vpop.f32.mrf.mxu0
  %489 = vmatprep.mubr.bf16.mxu0 0
  %490 = vmatmul.mubr.bf16.gmra.mxu0 %v237
  %v491 = vpop.f32.mrf.mxu0
  %v492 = vadd.f32 %v146, %v491
  %v493 = vpop.f32.mrf.mxu0
  %v494 = vpop.f32.mrf.mxu0
  %v495 = vadd.f32 %v146, %v494
  %v496 = vpop.f32.mrf.mxu0
  %497 = vmatprep.mubr.bf16.mxu0 0
  %498 = vmatmul.mubr.bf16.gmra.mxu0 %v240
  %v499 = vpop.f32.mrf.mxu0
  %v500 = vadd.f32 %v146, %v499
  %v501 = vpop.f32.mrf.mxu0
  %v502 = vpop.f32.mrf.mxu0
  %v503 = vadd.f32 %v146, %v502
  %v504 = vpop.f32.mrf.mxu0
  %505 = vmatprep.mubr.bf16.mxu0 0
  %506 = vmatmul.mubr.bf16.gmra.mxu0 %v243
  %v507 = vpop.f32.mrf.mxu0
  %v508 = vadd.f32 %v146, %v507
  %v509 = vpop.f32.mrf.mxu0
  %v510 = vpop.f32.mrf.mxu0
  %v511 = vadd.f32 %v146, %v510
  %v512 = vpop.f32.mrf.mxu0
  %513 = vmatprep.mubr.bf16.mxu0 0
  %514 = vmatmul.mubr.bf16.gmra.mxu0 %v246
  %v515 = vpop.f32.mrf.mxu0
  %v516 = vadd.f32 %v146, %v515
  %v517 = vpop.f32.mrf.mxu0
  %v518 = vpop.f32.mrf.mxu0
  %v519 = vadd.f32 %v146, %v518
  %v520 = vpop.f32.mrf.mxu0
  %521 = vmatprep.mubr.bf16.mxu0 0
  %522 = vmatmul.mubr.bf16.gmra.mxu0 %v249
  %v523 = vpop.f32.mrf.mxu0
  %v524 = vadd.f32 %v146, %v523
  %v525 = vpop.f32.mrf.mxu0
  %v526 = vpop.f32.mrf.mxu0
  %v527 = vadd.f32 %v146, %v526
  %v528 = vpop.f32.mrf.mxu0
  %529 = vmatprep.mubr.bf16.mxu0 0
  %530 = vmatmul.mubr.bf16.gmra.mxu0 %v252
  %v531 = vpop.f32.mrf.mxu0
  %v532 = vadd.f32 %v146, %v531
  %v533 = vpop.f32.mrf.mxu0
  %v534 = vpop.f32.mrf.mxu0
  %v535 = vadd.f32 %v146, %v534
  %v536 = vpop.f32.mrf.mxu0
  %537 = vmatprep.mubr.bf16.mxu0 0
  %538 = vmatmul.mubr.bf16.gmra.mxu0 %v255
  %v539 = vpop.f32.mrf.mxu0
  %v540 = vadd.f32 %v146, %v539
  %v541 = vpop.f32.mrf.mxu0
  %v542 = vpop.f32.mrf.mxu0
  %v543 = vadd.f32 %v146, %v542
  %v544 = vpop.f32.mrf.mxu0
  %545 = vdwg.mxu0
  %v546 = vmax.f32 %v292, 0.0
  %v547 = vmax.f32 %v295, 0.0
  %v548 = vmax.f32 %v300, 0.0
  %v549 = vmax.f32 %v303, 0.0
  %v550 = vmax.f32 %v308, 0.0
  %v551 = vmax.f32 %v311, 0.0
  %v552 = vmax.f32 %v316, 0.0
  %v553 = vmax.f32 %v319, 0.0
  %v554 = vmax.f32 %v324, 0.0
  %v555 = vmax.f32 %v327, 0.0
  %v556 = vmax.f32 %v332, 0.0
  %v557 = vmax.f32 %v335, 0.0
  %v558 = vmax.f32 %v340, 0.0
  %v559 = vmax.f32 %v343, 0.0
  %v560 = vmax.f32 %v348, 0.0
  %v561 = vmax.f32 %v351, 0.0
  %v562 = vmax.f32 %v356, 0.0
  %v563 = vmax.f32 %v359, 0.0
  %v564 = vmax.f32 %v364, 0.0
  %v565 = vmax.f32 %v367, 0.0
  %v566 = vmax.f32 %v372, 0.0
  %v567 = vmax.f32 %v375, 0.0
  %v568 = vmax.f32 %v380, 0.0
  %v569 = vmax.f32 %v383, 0.0
  %v570 = vmax.f32 %v388, 0.0
  %v571 = vmax.f32 %v391, 0.0
  %v572 = vmax.f32 %v396, 0.0
  %v573 = vmax.f32 %v399, 0.0
  %v574 = vmax.f32 %v404, 0.0
  %v575 = vmax.f32 %v407, 0.0
  %v576 = vmax.f32 %v412, 0.0
  %v577 = vmax.f32 %v415, 0.0
  %v578 = vmax.f32 %v420, 0.0
  %v579 = vmax.f32 %v423, 0.0
  %v580 = vmax.f32 %v428, 0.0
  %v581 = vmax.f32 %v431, 0.0
  %v582 = vmax.f32 %v436, 0.0
  %v583 = vmax.f32 %v439, 0.0
  %v584 = vmax.f32 %v444, 0.0
  %v585 = vmax.f32 %v447, 0.0
  %v586 = vmax.f32 %v452, 0.0
  %v587 = vmax.f32 %v455, 0.0
  %v588 = vmax.f32 %v460, 0.0
  %v589 = vmax.f32 %v463, 0.0
  %v590 = vmax.f32 %v468, 0.0
  %v591 = vmax.f32 %v471, 0.0
  %v592 = vmax.f32 %v476, 0.0
  %v593 = vmax.f32 %v479, 0.0
  %v594 = vmax.f32 %v484, 0.0
  %v595 = vmax.f32 %v487, 0.0
  %v596 = vmax.f32 %v492, 0.0
  %v597 = vmax.f32 %v495, 0.0
  %v598 = vmax.f32 %v500, 0.0
  %v599 = vmax.f32 %v503, 0.0
  %v600 = vmax.f32 %v508, 0.0
  %v601 = vmax.f32 %v511, 0.0
  %v602 = vmax.f32 %v516, 0.0
  %v603 = vmax.f32 %v519, 0.0
  %v604 = vmax.f32 %v524, 0.0
  %v605 = vmax.f32 %v527, 0.0
  %v606 = vmax.f32 %v532, 0.0
  %v607 = vmax.f32 %v535, 0.0
  %v608 = vmax.f32 %v540, 0.0
  %v609 = vmax.f32 %v543, 0.0
  %v610 = vpack.c.bf16 %v547, %v546
  %v611 = vpack.c.bf16 %v549, %v548
  %v612 = vpack.c.bf16 %v551, %v550
  %v613 = vpack.c.bf16 %v553, %v552
  %v614 = vpack.c.bf16 %v555, %v554
  %v615 = vpack.c.bf16 %v557, %v556
  %v616 = vpack.c.bf16 %v559, %v558
  %v617 = vpack.c.bf16 %v561, %v560
  %v618 = vpack.c.bf16 %v563, %v562
  %v619 = vpack.c.bf16 %v565, %v564
  %v620 = vpack.c.bf16 %v567, %v566
  %v621 = vpack.c.bf16 %v569, %v568
  %v622 = vpack.c.bf16 %v571, %v570
  %v623 = vpack.c.bf16 %v573, %v572
  %v624 = vpack.c.bf16 %v575, %v574
  %v625 = vpack.c.bf16 %v577, %v576
  %v626 = vpack.c.bf16 %v579, %v578
  %v627 = vpack.c.bf16 %v581, %v580
  %v628 = vpack.c.bf16 %v583, %v582
  %v629 = vpack.c.bf16 %v585, %v584
  %v630 = vpack.c.bf16 %v587, %v586
  %v631 = vpack.c.bf16 %v589, %v588
  %v632 = vpack.c.bf16 %v591, %v590
  %v633 = vpack.c.bf16 %v593, %v592
  %v634 = vpack.c.bf16 %v595, %v594
  %v635 = vpack.c.bf16 %v597, %v596
  %v636 = vpack.c.bf16 %v599, %v598
  %v637 = vpack.c.bf16 %v601, %v600
  %v638 = vpack.c.bf16 %v603, %v602
  %v639 = vpack.c.bf16 %v605, %v604
  %v640 = vpack.c.bf16 %v607, %v606
  %v641 = vpack.c.bf16 %v609, %v608
  %v642 = vld [vmem:[%s3] sm:$0xf]
  %v643 = vld [vmem:[%s3 + $0x4] sm:$0xf]
  %v644 = vld [vmem:[%s3 + $0x8] sm:$0xf]
  %v645 = vld [vmem:[%s3 + $0xc] sm:$0xf]
  %v646 = vld [vmem:[%s3 + $0x10] sm:$0xf]
  %v647 = vld [vmem:[%s3 + $0x14] sm:$0xf]
  %v648 = vld [vmem:[%s3 + $0x18] sm:$0xf]
  %v649 = vld [vmem:[%s3 + $0x1c] sm:$0xf]
  %v650 = vld [vmem:[%s4] sm:$0x1]
  %v652 = vlaneseq
  %v653 = vshrl.u32 %v652, 7
  %v654 = vsub.s32 0, %v653
  %v655 = vrot.slane %v650, %v654
  %v665 = vunpack.c.l.b16 %v642
  %v666 = vunpack.c.l.b16 %v643
  %v667 = vunpack.c.l.b16 %v644
  %v668 = vunpack.c.l.b16 %v645
  %v669 = vunpack.c.l.b16 %v646
  %v670 = vunpack.c.l.b16 %v647
  %v671 = vunpack.c.l.b16 %v648
  %v672 = vunpack.c.l.b16 %v649
  %v673 = vpack.c.b16 %v666, %v665
  %v674 = vpack.c.b16 %v668, %v667
  %v675 = vpack.c.b16 %v670, %v669
  %v676 = vpack.c.b16 %v672, %v671
  %vm681 = vcmask 523264
  %v683 = vsel %vm681, %v610, 0
  %v686 = vsel %vm681, %v611, 0
  %v689 = vsel %vm681, %v612, 0
  %v692 = vsel %vm681, %v613, 0
  %v695 = vsel %vm681, %v614, 0
  %v698 = vsel %vm681, %v615, 0
  %v701 = vsel %vm681, %v616, 0
  %v704 = vsel %vm681, %v617, 0
  %v707 = vsel %vm681, %v618, 0
  %v710 = vsel %vm681, %v619, 0
  %v713 = vsel %vm681, %v620, 0
  %v716 = vsel %vm681, %v621, 0
  %v719 = vsel %vm681, %v622, 0
  %v722 = vsel %vm681, %v623, 0
  %v725 = vsel %vm681, %v624, 0
  %v728 = vsel %vm681, %v625, 0
  %v731 = vsel %vm681, %v626, 0
  %v734 = vsel %vm681, %v627, 0
  %v737 = vsel %vm681, %v628, 0
  %v740 = vsel %vm681, %v629, 0
  %v743 = vsel %vm681, %v630, 0
  %v746 = vsel %vm681, %v631, 0
  %v749 = vsel %vm681, %v632, 0
  %v752 = vsel %vm681, %v633, 0
  %v755 = vsel %vm681, %v634, 0
  %v758 = vsel %vm681, %v635, 0
  %v761 = vsel %vm681, %v636, 0
  %v764 = vsel %vm681, %v637, 0
  %v767 = vsel %vm681, %v638, 0
  %v770 = vsel %vm681, %v639, 0
  %v773 = vsel %vm681, %v640, 0
  %v776 = vsel %vm681, %v641, 0
  %778 = vmatprep.subr.bf16.mxu0 0
  %779 = vmatpush1.bf16.msra.mxu0 0
  %780 = vmatprep.subr.bf16.mxu0 0
  %781 = vmatpush1.bf16.msra.mxu0 0
  %782 = vmatprep.subr.bf16.mxu0 0
  %783 = vmatpush1.bf16.msra.mxu0 0
  %784 = vmatprep.subr.bf16.mxu0 0
  %785 = vmatpush1.bf16.msra.mxu0 0
  %786 = vmatprep.subr.bf16.mxu0 0
  %787 = vmatpush1.bf16.msra.mxu0 %v676
  %788 = vmatprep.subr.bf16.mxu0 0
  %789 = vmatpush1.bf16.msra.mxu0 %v675
  %790 = vmatprep.subr.bf16.mxu0 0
  %791 = vmatpush1.bf16.msra.mxu0 %v674
  %792 = vmatprep.subr.bf16.mxu0 0
  %793 = vmatpush1.bf16.msra.mxu0 %v673
  %794 = vmatprep.subr.bf16.mxu0 0
  %795 = vmatpush2.bf16.msra.mxu0 0
  %796 = vmatprep.subr.bf16.mxu0 0
  %797 = vmatpush2.bf16.msra.mxu0 0
  %798 = vmatprep.subr.bf16.mxu0 0
  %799 = vmatpush2.bf16.msra.mxu0 0
  %800 = vmatprep.subr.bf16.mxu0 0
  %801 = vmatpush2.bf16.msra.mxu0 0
  %802 = vmatprep.subr.bf16.mxu0 0
  %803 = vmatpush2.bf16.msra.mxu0 0
  %804 = vmatprep.subr.bf16.mxu0 0
  %805 = vmatpush2.bf16.msra.mxu0 0
  %806 = vmatprep.subr.bf16.mxu0 0
  %807 = vmatpush2.bf16.msra.mxu0 0
  %808 = vmatprep.subr.bf16.mxu0 0
  %809 = vmatpush2.bf16.msra.mxu0 0
  %810 = vmatprep.mubr.bf16.mxu0 0
  %811 = vmatmul.mubr.bf16.gmra.mxu0 %v683
  %v812 = vpop.f32.mrf.mxu0
  %v813 = vadd.f32 %v655, %v812
  %v814 = vpop.f32.mrf.mxu0
  %v815 = vpop.f32.mrf.mxu0
  %v816 = vadd.f32 %v655, %v815
  %v817 = vpop.f32.mrf.mxu0
  %818 = vmatprep.mubr.bf16.mxu0 0
  %819 = vmatmul.mubr.bf16.gmra.mxu0 %v686
  %v820 = vpop.f32.mrf.mxu0
  %v821 = vadd.f32 %v655, %v820
  %v822 = vpop.f32.mrf.mxu0
  %v823 = vpop.f32.mrf.mxu0
  %v824 = vadd.f32 %v655, %v823
  %v825 = vpop.f32.mrf.mxu0
  %826 = vmatprep.mubr.bf16.mxu0 0
  %827 = vmatmul.mubr.bf16.gmra.mxu0 %v689
  %v828 = vpop.f32.mrf.mxu0
  %v829 = vadd.f32 %v655, %v828
  %v830 = vpop.f32.mrf.mxu0
  %v831 = vpop.f32.mrf.mxu0
  %v832 = vadd.f32 %v655, %v831
  %v833 = vpop.f32.mrf.mxu0
  %834 = vmatprep.mubr.bf16.mxu0 0
  %835 = vmatmul.mubr.bf16.gmra.mxu0 %v692
  %v836 = vpop.f32.mrf.mxu0
  %v837 = vadd.f32 %v655, %v836
  %v838 = vpop.f32.mrf.mxu0
  %v839 = vpop.f32.mrf.mxu0
  %v840 = vadd.f32 %v655, %v839
  %v841 = vpop.f32.mrf.mxu0
  %842 = vmatprep.mubr.bf16.mxu0 0
  %843 = vmatmul.mubr.bf16.gmra.mxu0 %v695
  %v844 = vpop.f32.mrf.mxu0
  %v845 = vadd.f32 %v655, %v844
  %v846 = vpop.f32.mrf.mxu0
  %v847 = vpop.f32.mrf.mxu0
  %v848 = vadd.f32 %v655, %v847
  %v849 = vpop.f32.mrf.mxu0
  %850 = vmatprep.mubr.bf16.mxu0 0
  %851 = vmatmul.mubr.bf16.gmra.mxu0 %v698
  %v852 = vpop.f32.mrf.mxu0
  %v853 = vadd.f32 %v655, %v852
  %v854 = vpop.f32.mrf.mxu0
  %v855 = vpop.f32.mrf.mxu0
  %v856 = vadd.f32 %v655, %v855
  %v857 = vpop.f32.mrf.mxu0
  %858 = vmatprep.mubr.bf16.mxu0 0
  %859 = vmatmul.mubr.bf16.gmra.mxu0 %v701
  %v860 = vpop.f32.mrf.mxu0
  %v861 = vadd.f32 %v655, %v860
  %v862 = vpop.f32.mrf.mxu0
  %v863 = vpop.f32.mrf.mxu0
  %v864 = vadd.f32 %v655, %v863
  %v865 = vpop.f32.mrf.mxu0
  %866 = vmatprep.mubr.bf16.mxu0 0
  %867 = vmatmul.mubr.bf16.gmra.mxu0 %v704
  %v868 = vpop.f32.mrf.mxu0
  %v869 = vadd.f32 %v655, %v868
  %v870 = vpop.f32.mrf.mxu0
  %v871 = vpop.f32.mrf.mxu0
  %v872 = vadd.f32 %v655, %v871
  %v873 = vpop.f32.mrf.mxu0
  %874 = vmatprep.mubr.bf16.mxu0 0
  %875 = vmatmul.mubr.bf16.gmra.mxu0 %v707
  %v876 = vpop.f32.mrf.mxu0
  %v877 = vadd.f32 %v655, %v876
  %v878 = vpop.f32.mrf.mxu0
  %v879 = vpop.f32.mrf.mxu0
  %v880 = vadd.f32 %v655, %v879
  %v881 = vpop.f32.mrf.mxu0
  %882 = vmatprep.mubr.bf16.mxu0 0
  %883 = vmatmul.mubr.bf16.gmra.mxu0 %v710
  %v884 = vpop.f32.mrf.mxu0
  %v885 = vadd.f32 %v655, %v884
  %v886 = vpop.f32.mrf.mxu0
  %v887 = vpop.f32.mrf.mxu0
  %v888 = vadd.f32 %v655, %v887
  %v889 = vpop.f32.mrf.mxu0
  %890 = vmatprep.mubr.bf16.mxu0 0
  %891 = vmatmul.mubr.bf16.gmra.mxu0 %v713
  %v892 = vpop.f32.mrf.mxu0
  %v893 = vadd.f32 %v655, %v892
  %v894 = vpop.f32.mrf.mxu0
  %v895 = vpop.f32.mrf.mxu0
  %v896 = vadd.f32 %v655, %v895
  %v897 = vpop.f32.mrf.mxu0
  %898 = vmatprep.mubr.bf16.mxu0 0
  %899 = vmatmul.mubr.bf16.gmra.mxu0 %v716
  %v900 = vpop.f32.mrf.mxu0
  %v901 = vadd.f32 %v655, %v900
  %v902 = vpop.f32.mrf.mxu0
  %v903 = vpop.f32.mrf.mxu0
  %v904 = vadd.f32 %v655, %v903
  %v905 = vpop.f32.mrf.mxu0
  %906 = vmatprep.mubr.bf16.mxu0 0
  %907 = vmatmul.mubr.bf16.gmra.mxu0 %v719
  %v908 = vpop.f32.mrf.mxu0
  %v909 = vadd.f32 %v655, %v908
  %v910 = vpop.f32.mrf.mxu0
  %v911 = vpop.f32.mrf.mxu0
  %v912 = vadd.f32 %v655, %v911
  %v913 = vpop.f32.mrf.mxu0
  %914 = vmatprep.mubr.bf16.mxu0 0
  %915 = vmatmul.mubr.bf16.gmra.mxu0 %v722
  %v916 = vpop.f32.mrf.mxu0
  %v917 = vadd.f32 %v655, %v916
  %v918 = vpop.f32.mrf.mxu0
  %v919 = vpop.f32.mrf.mxu0
  %v920 = vadd.f32 %v655, %v919
  %v921 = vpop.f32.mrf.mxu0
  %922 = vmatprep.mubr.bf16.mxu0 0
  %923 = vmatmul.mubr.bf16.gmra.mxu0 %v725
  %v924 = vpop.f32.mrf.mxu0
  %v925 = vadd.f32 %v655, %v924
  %v926 = vpop.f32.mrf.mxu0
  %v927 = vpop.f32.mrf.mxu0
  %v928 = vadd.f32 %v655, %v927
  %v929 = vpop.f32.mrf.mxu0
  %930 = vmatprep.mubr.bf16.mxu0 0
  %931 = vmatmul.mubr.bf16.gmra.mxu0 %v728
  %v932 = vpop.f32.mrf.mxu0
  %v933 = vadd.f32 %v655, %v932
  %v934 = vpop.f32.mrf.mxu0
  %v935 = vpop.f32.mrf.mxu0
  %v936 = vadd.f32 %v655, %v935
  %v937 = vpop.f32.mrf.mxu0
  %938 = vmatprep.mubr.bf16.mxu0 0
  %939 = vmatmul.mubr.bf16.gmra.mxu0 %v731
  %v940 = vpop.f32.mrf.mxu0
  %v941 = vadd.f32 %v655, %v940
  %v942 = vpop.f32.mrf.mxu0
  %v943 = vpop.f32.mrf.mxu0
  %v944 = vadd.f32 %v655, %v943
  %v945 = vpop.f32.mrf.mxu0
  %946 = vmatprep.mubr.bf16.mxu0 0
  %947 = vmatmul.mubr.bf16.gmra.mxu0 %v734
  %v948 = vpop.f32.mrf.mxu0
  %v949 = vadd.f32 %v655, %v948
  %v950 = vpop.f32.mrf.mxu0
  %v951 = vpop.f32.mrf.mxu0
  %v952 = vadd.f32 %v655, %v951
  %v953 = vpop.f32.mrf.mxu0
  %954 = vmatprep.mubr.bf16.mxu0 0
  %955 = vmatmul.mubr.bf16.gmra.mxu0 %v737
  %v956 = vpop.f32.mrf.mxu0
  %v957 = vadd.f32 %v655, %v956
  %v958 = vpop.f32.mrf.mxu0
  %v959 = vpop.f32.mrf.mxu0
  %v960 = vadd.f32 %v655, %v959
  %v961 = vpop.f32.mrf.mxu0
  %962 = vmatprep.mubr.bf16.mxu0 0
  %963 = vmatmul.mubr.bf16.gmra.mxu0 %v740
  %v964 = vpop.f32.mrf.mxu0
  %v965 = vadd.f32 %v655, %v964
  %v966 = vpop.f32.mrf.mxu0
  %v967 = vpop.f32.mrf.mxu0
  %v968 = vadd.f32 %v655, %v967
  %v969 = vpop.f32.mrf.mxu0
  %970 = vmatprep.mubr.bf16.mxu0 0
  %971 = vmatmul.mubr.bf16.gmra.mxu0 %v743
  %v972 = vpop.f32.mrf.mxu0
  %v973 = vadd.f32 %v655, %v972
  %v974 = vpop.f32.mrf.mxu0
  %v975 = vpop.f32.mrf.mxu0
  %v976 = vadd.f32 %v655, %v975
  %v977 = vpop.f32.mrf.mxu0
  %978 = vmatprep.mubr.bf16.mxu0 0
  %979 = vmatmul.mubr.bf16.gmra.mxu0 %v746
  %v980 = vpop.f32.mrf.mxu0
  %v981 = vadd.f32 %v655, %v980
  %v982 = vpop.f32.mrf.mxu0
  %v983 = vpop.f32.mrf.mxu0
  %v984 = vadd.f32 %v655, %v983
  %v985 = vpop.f32.mrf.mxu0
  %986 = vmatprep.mubr.bf16.mxu0 0
  %987 = vmatmul.mubr.bf16.gmra.mxu0 %v749
  %v988 = vpop.f32.mrf.mxu0
  %v989 = vadd.f32 %v655, %v988
  %v990 = vpop.f32.mrf.mxu0
  %v991 = vpop.f32.mrf.mxu0
  %v992 = vadd.f32 %v655, %v991
  %v993 = vpop.f32.mrf.mxu0
  %994 = vmatprep.mubr.bf16.mxu0 0
  %995 = vmatmul.mubr.bf16.gmra.mxu0 %v752
  %v996 = vpop.f32.mrf.mxu0
  %v997 = vadd.f32 %v655, %v996
  %v998 = vpop.f32.mrf.mxu0
  %v999 = vpop.f32.mrf.mxu0
  %v1000 = vadd.f32 %v655, %v999
  %v1001 = vpop.f32.mrf.mxu0
  %1002 = vmatprep.mubr.bf16.mxu0 0
  %1003 = vmatmul.mubr.bf16.gmra.mxu0 %v755
  %v1004 = vpop.f32.mrf.mxu0
  %v1005 = vadd.f32 %v655, %v1004
  %v1006 = vpop.f32.mrf.mxu0
  %v1007 = vpop.f32.mrf.mxu0
  %v1008 = vadd.f32 %v655, %v1007
  %v1009 = vpop.f32.mrf.mxu0
  %1010 = vmatprep.mubr.bf16.mxu0 0
  %1011 = vmatmul.mubr.bf16.gmra.mxu0 %v758
  %v1012 = vpop.f32.mrf.mxu0
  %v1013 = vadd.f32 %v655, %v1012
  %v1014 = vpop.f32.mrf.mxu0
  %v1015 = vpop.f32.mrf.mxu0
  %v1016 = vadd.f32 %v655, %v1015
  %v1017 = vpop.f32.mrf.mxu0
  %1018 = vmatprep.mubr.bf16.mxu0 0
  %1019 = vmatmul.mubr.bf16.gmra.mxu0 %v761
  %v1020 = vpop.f32.mrf.mxu0
  %v1021 = vadd.f32 %v655, %v1020
  %v1022 = vpop.f32.mrf.mxu0
  %v1023 = vpop.f32.mrf.mxu0
  %v1024 = vadd.f32 %v655, %v1023
  %v1025 = vpop.f32.mrf.mxu0
  %1026 = vmatprep.mubr.bf16.mxu0 0
  %1027 = vmatmul.mubr.bf16.gmra.mxu0 %v764
  %v1028 = vpop.f32.mrf.mxu0
  %v1029 = vadd.f32 %v655, %v1028
  %v1030 = vpop.f32.mrf.mxu0
  %v1031 = vpop.f32.mrf.mxu0
  %v1032 = vadd.f32 %v655, %v1031
  %v1033 = vpop.f32.mrf.mxu0
  %1034 = vmatprep.mubr.bf16.mxu0 0
  %1035 = vmatmul.mubr.bf16.gmra.mxu0 %v767
  %v1036 = vpop.f32.mrf.mxu0
  %v1037 = vadd.f32 %v655, %v1036
  %v1038 = vpop.f32.mrf.mxu0
  %v1039 = vpop.f32.mrf.mxu0
  %v1040 = vadd.f32 %v655, %v1039
  %v1041 = vpop.f32.mrf.mxu0
  %1042 = vmatprep.mubr.bf16.mxu0 0
  %1043 = vmatmul.mubr.bf16.gmra.mxu0 %v770
  %v1044 = vpop.f32.mrf.mxu0
  %v1045 = vadd.f32 %v655, %v1044
  %v1046 = vpop.f32.mrf.mxu0
  %v1047 = vpop.f32.mrf.mxu0
  %v1048 = vadd.f32 %v655, %v1047
  %v1049 = vpop.f32.mrf.mxu0
  %1050 = vmatprep.mubr.bf16.mxu0 0
  %1051 = vmatmul.mubr.bf16.gmra.mxu0 %v773
  %v1052 = vpop.f32.mrf.mxu0
  %v1053 = vadd.f32 %v655, %v1052
  %v1054 = vpop.f32.mrf.mxu0
  %v1055 = vpop.f32.mrf.mxu0
  %v1056 = vadd.f32 %v655, %v1055
  %v1057 = vpop.f32.mrf.mxu0
  %1058 = vmatprep.mubr.bf16.mxu0 0
  %1059 = vmatmul.mubr.bf16.gmra.mxu0 %v776
  %v1060 = vpop.f32.mrf.mxu0
  %v1061 = vadd.f32 %v655, %v1060
  %v1062 = vpop.f32.mrf.mxu0
  %v1063 = vpop.f32.mrf.mxu0
  %v1064 = vadd.f32 %v655, %v1063
  %v1065 = vpop.f32.mrf.mxu0
  %1066 = vdwg.mxu0
  %v1067 = vpack.c.bf16 %v816, %v813
  %v1068 = vpack.c.bf16 %v824, %v821
  %v1069 = vpack.c.bf16 %v832, %v829
  %v1070 = vpack.c.bf16 %v840, %v837
  %v1071 = vpack.c.bf16 %v848, %v845
  %v1072 = vpack.c.bf16 %v856, %v853
  %v1073 = vpack.c.bf16 %v864, %v861
  %v1074 = vpack.c.bf16 %v872, %v869
  %v1075 = vpack.c.bf16 %v880, %v877
  %v1076 = vpack.c.bf16 %v888, %v885
  %v1077 = vpack.c.bf16 %v896, %v893
  %v1078 = vpack.c.bf16 %v904, %v901
  %v1079 = vpack.c.bf16 %v912, %v909
  %v1080 = vpack.c.bf16 %v920, %v917
  %v1081 = vpack.c.bf16 %v928, %v925
  %v1082 = vpack.c.bf16 %v936, %v933
  %v1083 = vpack.c.bf16 %v944, %v941
  %v1084 = vpack.c.bf16 %v952, %v949
  %v1085 = vpack.c.bf16 %v960, %v957
  %v1086 = vpack.c.bf16 %v968, %v965
  %v1087 = vpack.c.bf16 %v976, %v973
  %v1088 = vpack.c.bf16 %v984, %v981
  %v1089 = vpack.c.bf16 %v992, %v989
  %v1090 = vpack.c.bf16 %v1000, %v997
  %v1091 = vpack.c.bf16 %v1008, %v1005
  %v1092 = vpack.c.bf16 %v1016, %v1013
  %v1093 = vpack.c.bf16 %v1024, %v1021
  %v1094 = vpack.c.bf16 %v1032, %v1029
  %v1095 = vpack.c.bf16 %v1040, %v1037
  %v1096 = vpack.c.bf16 %v1048, %v1045
  %v1097 = vpack.c.bf16 %v1056, %v1053
  %v1098 = vpack.c.bf16 %v1064, %v1061
  %v1099 = vld [vmem:[%s5] sm:$0xf]
  %v1100 = vld [vmem:[%s5 + $0x4] sm:$0xf]
  %v1101 = vld [vmem:[%s6] sm:$0x1]
  %v1103 = vlaneseq
  %v1104 = vshrl.u32 %v1103, 7
  %v1105 = vsub.s32 0, %v1104
  %v1106 = vrot.slane %v1101, %v1105
  %v1110 = vunpack.c.l.b16 %v1099
  %v1111 = vunpack.c.l.b16 %v1100
  %v1112 = vpack.c.b16 %v1111, %v1110
  %vm1114 = vcmask 130048
  %v1116 = vsel %vm1114, %v1067, 0
  %v1119 = vsel %vm1114, %v1068, 0
  %v1122 = vsel %vm1114, %v1069, 0
  %v1125 = vsel %vm1114, %v1070, 0
  %v1128 = vsel %vm1114, %v1071, 0
  %v1131 = vsel %vm1114, %v1072, 0
  %v1134 = vsel %vm1114, %v1073, 0
  %v1137 = vsel %vm1114, %v1074, 0
  %v1140 = vsel %vm1114, %v1075, 0
  %v1143 = vsel %vm1114, %v1076, 0
  %v1146 = vsel %vm1114, %v1077, 0
  %v1149 = vsel %vm1114, %v1078, 0
  %v1152 = vsel %vm1114, %v1079, 0
  %v1155 = vsel %vm1114, %v1080, 0
  %v1158 = vsel %vm1114, %v1081, 0
  %v1161 = vsel %vm1114, %v1082, 0
  %v1164 = vsel %vm1114, %v1083, 0
  %v1167 = vsel %vm1114, %v1084, 0
  %v1170 = vsel %vm1114, %v1085, 0
  %v1173 = vsel %vm1114, %v1086, 0
  %v1176 = vsel %vm1114, %v1087, 0
  %v1179 = vsel %vm1114, %v1088, 0
  %v1182 = vsel %vm1114, %v1089, 0
  %v1185 = vsel %vm1114, %v1090, 0
  %v1188 = vsel %vm1114, %v1091, 0
  %v1191 = vsel %vm1114, %v1092, 0
  %v1194 = vsel %vm1114, %v1093, 0
  %v1197 = vsel %vm1114, %v1094, 0
  %v1200 = vsel %vm1114, %v1095, 0
  %v1203 = vsel %vm1114, %v1096, 0
  %v1206 = vsel %vm1114, %v1097, 0
  %v1209 = vsel %vm1114, %v1098, 0
  %1211 = vmatprep.subr.bf16.mxu0 0
  %1212 = vmatpush1.bf16.msra.mxu0 0
  %1213 = vmatprep.subr.bf16.mxu0 0
  %1214 = vmatpush1.bf16.msra.mxu0 0
  %1215 = vmatprep.subr.bf16.mxu0 0
  %1216 = vmatpush1.bf16.msra.mxu0 0
  %1217 = vmatprep.subr.bf16.mxu0 0
  %1218 = vmatpush1.bf16.msra.mxu0 0
  %1219 = vmatprep.subr.bf16.mxu0 0
  %1220 = vmatpush1.bf16.msra.mxu0 0
  %1221 = vmatprep.subr.bf16.mxu0 0
  %1222 = vmatpush1.bf16.msra.mxu0 0
  %1223 = vmatprep.subr.bf16.mxu0 0
  %1224 = vmatpush1.bf16.msra.mxu0 0
  %1225 = vmatprep.subr.bf16.mxu0 0
  %1226 = vmatpush1.bf16.msra.mxu0 %v1112
  %1227 = vmatprep.subr.bf16.mxu0 0
  %1228 = vmatpush2.bf16.msra.mxu0 0
  %1229 = vmatprep.subr.bf16.mxu0 0
  %1230 = vmatpush2.bf16.msra.mxu0 0
  %1231 = vmatprep.subr.bf16.mxu0 0
  %1232 = vmatpush2.bf16.msra.mxu0 0
  %1233 = vmatprep.subr.bf16.mxu0 0
  %1234 = vmatpush2.bf16.msra.mxu0 0
  %1235 = vmatprep.subr.bf16.mxu0 0
  %1236 = vmatpush2.bf16.msra.mxu0 0
  %1237 = vmatprep.subr.bf16.mxu0 0
  %1238 = vmatpush2.bf16.msra.mxu0 0
  %1239 = vmatprep.subr.bf16.mxu0 0
  %1240 = vmatpush2.bf16.msra.mxu0 0
  %1241 = vmatprep.subr.bf16.mxu0 0
  %1242 = vmatpush2.bf16.msra.mxu0 0
  %1243 = vmatprep.mubr.bf16.mxu0 0
  %1244 = vmatmul.mubr.bf16.gmra.mxu0 %v1116
  %v1245 = vpop.f32.mrf.mxu0
  %v1246 = vadd.f32 %v1106, %v1245
  %v1247 = vpop.f32.mrf.mxu0
  %v1248 = vpop.f32.mrf.mxu0
  %v1249 = vadd.f32 %v1106, %v1248
  %v1250 = vpop.f32.mrf.mxu0
  %1251 = vmatprep.mubr.bf16.mxu0 0
  %1252 = vmatmul.mubr.bf16.gmra.mxu0 %v1119
  %v1253 = vpop.f32.mrf.mxu0
  %v1254 = vadd.f32 %v1106, %v1253
  %v1255 = vpop.f32.mrf.mxu0
  %v1256 = vpop.f32.mrf.mxu0
  %v1257 = vadd.f32 %v1106, %v1256
  %v1258 = vpop.f32.mrf.mxu0
  %1259 = vmatprep.mubr.bf16.mxu0 0
  %1260 = vmatmul.mubr.bf16.gmra.mxu0 %v1122
  %v1261 = vpop.f32.mrf.mxu0
  %v1262 = vadd.f32 %v1106, %v1261
  %v1263 = vpop.f32.mrf.mxu0
  %v1264 = vpop.f32.mrf.mxu0
  %v1265 = vadd.f32 %v1106, %v1264
  %v1266 = vpop.f32.mrf.mxu0
  %1267 = vmatprep.mubr.bf16.mxu0 0
  %1268 = vmatmul.mubr.bf16.gmra.mxu0 %v1125
  %v1269 = vpop.f32.mrf.mxu0
  %v1270 = vadd.f32 %v1106, %v1269
  %v1271 = vpop.f32.mrf.mxu0
  %v1272 = vpop.f32.mrf.mxu0
  %v1273 = vadd.f32 %v1106, %v1272
  %v1274 = vpop.f32.mrf.mxu0
  %1275 = vmatprep.mubr.bf16.mxu0 0
  %1276 = vmatmul.mubr.bf16.gmra.mxu0 %v1128
  %v1277 = vpop.f32.mrf.mxu0
  %v1278 = vadd.f32 %v1106, %v1277
  %v1279 = vpop.f32.mrf.mxu0
  %v1280 = vpop.f32.mrf.mxu0
  %v1281 = vadd.f32 %v1106, %v1280
  %v1282 = vpop.f32.mrf.mxu0
  %1283 = vmatprep.mubr.bf16.mxu0 0
  %1284 = vmatmul.mubr.bf16.gmra.mxu0 %v1131
  %v1285 = vpop.f32.mrf.mxu0
  %v1286 = vadd.f32 %v1106, %v1285
  %v1287 = vpop.f32.mrf.mxu0
  %v1288 = vpop.f32.mrf.mxu0
  %v1289 = vadd.f32 %v1106, %v1288
  %v1290 = vpop.f32.mrf.mxu0
  %1291 = vmatprep.mubr.bf16.mxu0 0
  %1292 = vmatmul.mubr.bf16.gmra.mxu0 %v1134
  %v1293 = vpop.f32.mrf.mxu0
  %v1294 = vadd.f32 %v1106, %v1293
  %v1295 = vpop.f32.mrf.mxu0
  %v1296 = vpop.f32.mrf.mxu0
  %v1297 = vadd.f32 %v1106, %v1296
  %v1298 = vpop.f32.mrf.mxu0
  %1299 = vmatprep.mubr.bf16.mxu0 0
  %1300 = vmatmul.mubr.bf16.gmra.mxu0 %v1137
  %v1301 = vpop.f32.mrf.mxu0
  %v1302 = vadd.f32 %v1106, %v1301
  %v1303 = vpop.f32.mrf.mxu0
  %v1304 = vpop.f32.mrf.mxu0
  %v1305 = vadd.f32 %v1106, %v1304
  %v1306 = vpop.f32.mrf.mxu0
  %1307 = vmatprep.mubr.bf16.mxu0 0
  %1308 = vmatmul.mubr.bf16.gmra.mxu0 %v1140
  %v1309 = vpop.f32.mrf.mxu0
  %v1310 = vadd.f32 %v1106, %v1309
  %v1311 = vpop.f32.mrf.mxu0
  %v1312 = vpop.f32.mrf.mxu0
  %v1313 = vadd.f32 %v1106, %v1312
  %v1314 = vpop.f32.mrf.mxu0
  %1315 = vmatprep.mubr.bf16.mxu0 0
  %1316 = vmatmul.mubr.bf16.gmra.mxu0 %v1143
  %v1317 = vpop.f32.mrf.mxu0
  %v1318 = vadd.f32 %v1106, %v1317
  %v1319 = vpop.f32.mrf.mxu0
  %v1320 = vpop.f32.mrf.mxu0
  %v1321 = vadd.f32 %v1106, %v1320
  %v1322 = vpop.f32.mrf.mxu0
  %1323 = vmatprep.mubr.bf16.mxu0 0
  %1324 = vmatmul.mubr.bf16.gmra.mxu0 %v1146
  %v1325 = vpop.f32.mrf.mxu0
  %v1326 = vadd.f32 %v1106, %v1325
  %v1327 = vpop.f32.mrf.mxu0
  %v1328 = vpop.f32.mrf.mxu0
  %v1329 = vadd.f32 %v1106, %v1328
  %v1330 = vpop.f32.mrf.mxu0
  %1331 = vmatprep.mubr.bf16.mxu0 0
  %1332 = vmatmul.mubr.bf16.gmra.mxu0 %v1149
  %v1333 = vpop.f32.mrf.mxu0
  %v1334 = vadd.f32 %v1106, %v1333
  %v1335 = vpop.f32.mrf.mxu0
  %v1336 = vpop.f32.mrf.mxu0
  %v1337 = vadd.f32 %v1106, %v1336
  %v1338 = vpop.f32.mrf.mxu0
  %1339 = vmatprep.mubr.bf16.mxu0 0
  %1340 = vmatmul.mubr.bf16.gmra.mxu0 %v1152
  %v1341 = vpop.f32.mrf.mxu0
  %v1342 = vadd.f32 %v1106, %v1341
  %v1343 = vpop.f32.mrf.mxu0
  %v1344 = vpop.f32.mrf.mxu0
  %v1345 = vadd.f32 %v1106, %v1344
  %v1346 = vpop.f32.mrf.mxu0
  %1347 = vmatprep.mubr.bf16.mxu0 0
  %1348 = vmatmul.mubr.bf16.gmra.mxu0 %v1155
  %v1349 = vpop.f32.mrf.mxu0
  %v1350 = vadd.f32 %v1106, %v1349
  %v1351 = vpop.f32.mrf.mxu0
  %v1352 = vpop.f32.mrf.mxu0
  %v1353 = vadd.f32 %v1106, %v1352
  %v1354 = vpop.f32.mrf.mxu0
  %1355 = vmatprep.mubr.bf16.mxu0 0
  %1356 = vmatmul.mubr.bf16.gmra.mxu0 %v1158
  %v1357 = vpop.f32.mrf.mxu0
  %v1358 = vadd.f32 %v1106, %v1357
  %v1359 = vpop.f32.mrf.mxu0
  %v1360 = vpop.f32.mrf.mxu0
  %v1361 = vadd.f32 %v1106, %v1360
  %v1362 = vpop.f32.mrf.mxu0
  %1363 = vmatprep.mubr.bf16.mxu0 0
  %1364 = vmatmul.mubr.bf16.gmra.mxu0 %v1161
  %v1365 = vpop.f32.mrf.mxu0
  %v1366 = vadd.f32 %v1106, %v1365
  %v1367 = vpop.f32.mrf.mxu0
  %v1368 = vpop.f32.mrf.mxu0
  %v1369 = vadd.f32 %v1106, %v1368
  %v1370 = vpop.f32.mrf.mxu0
  %1371 = vmatprep.mubr.bf16.mxu0 0
  %1372 = vmatmul.mubr.bf16.gmra.mxu0 %v1164
  %v1373 = vpop.f32.mrf.mxu0
  %v1374 = vadd.f32 %v1106, %v1373
  %v1375 = vpop.f32.mrf.mxu0
  %v1376 = vpop.f32.mrf.mxu0
  %v1377 = vadd.f32 %v1106, %v1376
  %v1378 = vpop.f32.mrf.mxu0
  %1379 = vmatprep.mubr.bf16.mxu0 0
  %1380 = vmatmul.mubr.bf16.gmra.mxu0 %v1167
  %v1381 = vpop.f32.mrf.mxu0
  %v1382 = vadd.f32 %v1106, %v1381
  %v1383 = vpop.f32.mrf.mxu0
  %v1384 = vpop.f32.mrf.mxu0
  %v1385 = vadd.f32 %v1106, %v1384
  %v1386 = vpop.f32.mrf.mxu0
  %1387 = vmatprep.mubr.bf16.mxu0 0
  %1388 = vmatmul.mubr.bf16.gmra.mxu0 %v1170
  %v1389 = vpop.f32.mrf.mxu0
  %v1390 = vadd.f32 %v1106, %v1389
  %v1391 = vpop.f32.mrf.mxu0
  %v1392 = vpop.f32.mrf.mxu0
  %v1393 = vadd.f32 %v1106, %v1392
  %v1394 = vpop.f32.mrf.mxu0
  %1395 = vmatprep.mubr.bf16.mxu0 0
  %1396 = vmatmul.mubr.bf16.gmra.mxu0 %v1173
  %v1397 = vpop.f32.mrf.mxu0
  %v1398 = vadd.f32 %v1106, %v1397
  %v1399 = vpop.f32.mrf.mxu0
  %v1400 = vpop.f32.mrf.mxu0
  %v1401 = vadd.f32 %v1106, %v1400
  %v1402 = vpop.f32.mrf.mxu0
  %1403 = vmatprep.mubr.bf16.mxu0 0
  %1404 = vmatmul.mubr.bf16.gmra.mxu0 %v1176
  %v1405 = vpop.f32.mrf.mxu0
  %v1406 = vadd.f32 %v1106, %v1405
  %v1407 = vpop.f32.mrf.mxu0
  %v1408 = vpop.f32.mrf.mxu0
  %v1409 = vadd.f32 %v1106, %v1408
  %v1410 = vpop.f32.mrf.mxu0
  %1411 = vmatprep.mubr.bf16.mxu0 0
  %1412 = vmatmul.mubr.bf16.gmra.mxu0 %v1179
  %v1413 = vpop.f32.mrf.mxu0
  %v1414 = vadd.f32 %v1106, %v1413
  %v1415 = vpop.f32.mrf.mxu0
  %v1416 = vpop.f32.mrf.mxu0
  %v1417 = vadd.f32 %v1106, %v1416
  %v1418 = vpop.f32.mrf.mxu0
  %1419 = vmatprep.mubr.bf16.mxu0 0
  %1420 = vmatmul.mubr.bf16.gmra.mxu0 %v1182
  %v1421 = vpop.f32.mrf.mxu0
  %v1422 = vadd.f32 %v1106, %v1421
  %v1423 = vpop.f32.mrf.mxu0
  %v1424 = vpop.f32.mrf.mxu0
  %v1425 = vadd.f32 %v1106, %v1424
  %v1426 = vpop.f32.mrf.mxu0
  %1427 = vmatprep.mubr.bf16.mxu0 0
  %1428 = vmatmul.mubr.bf16.gmra.mxu0 %v1185
  %v1429 = vpop.f32.mrf.mxu0
  %v1430 = vadd.f32 %v1106, %v1429
  %v1431 = vpop.f32.mrf.mxu0
  %v1432 = vpop.f32.mrf.mxu0
  %v1433 = vadd.f32 %v1106, %v1432
  %v1434 = vpop.f32.mrf.mxu0
  %1435 = vmatprep.mubr.bf16.mxu0 0
  %1436 = vmatmul.mubr.bf16.gmra.mxu0 %v1188
  %v1437 = vpop.f32.mrf.mxu0
  %v1438 = vadd.f32 %v1106, %v1437
  %v1439 = vpop.f32.mrf.mxu0
  %v1440 = vpop.f32.mrf.mxu0
  %v1441 = vadd.f32 %v1106, %v1440
  %v1442 = vpop.f32.mrf.mxu0
  %1443 = vmatprep.mubr.bf16.mxu0 0
  %1444 = vmatmul.mubr.bf16.gmra.mxu0 %v1191
  %v1445 = vpop.f32.mrf.mxu0
  %v1446 = vadd.f32 %v1106, %v1445
  %v1447 = vpop.f32.mrf.mxu0
  %v1448 = vpop.f32.mrf.mxu0
  %v1449 = vadd.f32 %v1106, %v1448
  %v1450 = vpop.f32.mrf.mxu0
  %1451 = vmatprep.mubr.bf16.mxu0 0
  %1452 = vmatmul.mubr.bf16.gmra.mxu0 %v1194
  %v1453 = vpop.f32.mrf.mxu0
  %v1454 = vadd.f32 %v1106, %v1453
  %v1455 = vpop.f32.mrf.mxu0
  %v1456 = vpop.f32.mrf.mxu0
  %v1457 = vadd.f32 %v1106, %v1456
  %v1458 = vpop.f32.mrf.mxu0
  %1459 = vmatprep.mubr.bf16.mxu0 0
  %1460 = vmatmul.mubr.bf16.gmra.mxu0 %v1197
  %v1461 = vpop.f32.mrf.mxu0
  %v1462 = vadd.f32 %v1106, %v1461
  %v1463 = vpop.f32.mrf.mxu0
  %v1464 = vpop.f32.mrf.mxu0
  %v1465 = vadd.f32 %v1106, %v1464
  %v1466 = vpop.f32.mrf.mxu0
  %1467 = vmatprep.mubr.bf16.mxu0 0
  %1468 = vmatmul.mubr.bf16.gmra.mxu0 %v1200
  %v1469 = vpop.f32.mrf.mxu0
  %v1470 = vadd.f32 %v1106, %v1469
  %v1471 = vpop.f32.mrf.mxu0
  %v1472 = vpop.f32.mrf.mxu0
  %v1473 = vadd.f32 %v1106, %v1472
  %v1474 = vpop.f32.mrf.mxu0
  %1475 = vmatprep.mubr.bf16.mxu0 0
  %1476 = vmatmul.mubr.bf16.gmra.mxu0 %v1203
  %v1477 = vpop.f32.mrf.mxu0
  %v1478 = vadd.f32 %v1106, %v1477
  %v1479 = vpop.f32.mrf.mxu0
  %v1480 = vpop.f32.mrf.mxu0
  %v1481 = vadd.f32 %v1106, %v1480
  %v1482 = vpop.f32.mrf.mxu0
  %1483 = vmatprep.mubr.bf16.mxu0 0
  %1484 = vmatmul.mubr.bf16.gmra.mxu0 %v1206
  %v1485 = vpop.f32.mrf.mxu0
  %v1486 = vadd.f32 %v1106, %v1485
  %v1487 = vpop.f32.mrf.mxu0
  %v1488 = vpop.f32.mrf.mxu0
  %v1489 = vadd.f32 %v1106, %v1488
  %v1490 = vpop.f32.mrf.mxu0
  %1491 = vmatprep.mubr.bf16.mxu0 0
  %1492 = vmatmul.mubr.bf16.gmra.mxu0 %v1209
  %v1493 = vpop.f32.mrf.mxu0
  %v1494 = vadd.f32 %v1106, %v1493
  %v1495 = vpop.f32.mrf.mxu0
  %v1496 = vpop.f32.mrf.mxu0
  %v1497 = vadd.f32 %v1106, %v1496
  %v1498 = vpop.f32.mrf.mxu0
  %1499 = vdwg.mxu0
  %v1500 = vmax.f32 %v1246, 0.0
  %v1501 = vmax.f32 %v1249, 0.0
  %v1502 = vmax.f32 %v1254, 0.0
  %v1503 = vmax.f32 %v1257, 0.0
  %v1504 = vmax.f32 %v1262, 0.0
  %v1505 = vmax.f32 %v1265, 0.0
  %v1506 = vmax.f32 %v1270, 0.0
  %v1507 = vmax.f32 %v1273, 0.0
  %v1508 = vmax.f32 %v1278, 0.0
  %v1509 = vmax.f32 %v1281, 0.0
  %v1510 = vmax.f32 %v1286, 0.0
  %v1511 = vmax.f32 %v1289, 0.0
  %v1512 = vmax.f32 %v1294, 0.0
  %v1513 = vmax.f32 %v1297, 0.0
  %v1514 = vmax.f32 %v1302, 0.0
  %v1515 = vmax.f32 %v1305, 0.0
  %v1516 = vmax.f32 %v1310, 0.0
  %v1517 = vmax.f32 %v1313, 0.0
  %v1518 = vmax.f32 %v1318, 0.0
  %v1519 = vmax.f32 %v1321, 0.0
  %v1520 = vmax.f32 %v1326, 0.0
  %v1521 = vmax.f32 %v1329, 0.0
  %v1522 = vmax.f32 %v1334, 0.0
  %v1523 = vmax.f32 %v1337, 0.0
  %v1524 = vmax.f32 %v1342, 0.0
  %v1525 = vmax.f32 %v1345, 0.0
  %v1526 = vmax.f32 %v1350, 0.0
  %v1527 = vmax.f32 %v1353, 0.0
  %v1528 = vmax.f32 %v1358, 0.0
  %v1529 = vmax.f32 %v1361, 0.0
  %v1530 = vmax.f32 %v1366, 0.0
  %v1531 = vmax.f32 %v1369, 0.0
  %v1532 = vmax.f32 %v1374, 0.0
  %v1533 = vmax.f32 %v1377, 0.0
  %v1534 = vmax.f32 %v1382, 0.0
  %v1535 = vmax.f32 %v1385, 0.0
  %v1536 = vmax.f32 %v1390, 0.0
  %v1537 = vmax.f32 %v1393, 0.0
  %v1538 = vmax.f32 %v1398, 0.0
  %v1539 = vmax.f32 %v1401, 0.0
  %v1540 = vmax.f32 %v1406, 0.0
  %v1541 = vmax.f32 %v1409, 0.0
  %v1542 = vmax.f32 %v1414, 0.0
  %v1543 = vmax.f32 %v1417, 0.0
  %v1544 = vmax.f32 %v1422, 0.0
  %v1545 = vmax.f32 %v1425, 0.0
  %v1546 = vmax.f32 %v1430, 0.0
  %v1547 = vmax.f32 %v1433, 0.0
  %v1548 = vmax.f32 %v1438, 0.0
  %v1549 = vmax.f32 %v1441, 0.0
  %v1550 = vmax.f32 %v1446, 0.0
  %v1551 = vmax.f32 %v1449, 0.0
  %v1552 = vmax.f32 %v1454, 0.0
  %v1553 = vmax.f32 %v1457, 0.0
  %v1554 = vmax.f32 %v1462, 0.0
  %v1555 = vmax.f32 %v1465, 0.0
  %v1556 = vmax.f32 %v1470, 0.0
  %v1557 = vmax.f32 %v1473, 0.0
  %v1558 = vmax.f32 %v1478, 0.0
  %v1559 = vmax.f32 %v1481, 0.0
  %v1560 = vmax.f32 %v1486, 0.0
  %v1561 = vmax.f32 %v1489, 0.0
  %v1562 = vmax.f32 %v1494, 0.0
  %v1563 = vmax.f32 %v1497, 0.0
  %v1564 = vpack.c.bf16 %v1501, %v1500
  %v1565 = vpack.c.bf16 %v1503, %v1502
  %v1566 = vpack.c.bf16 %v1505, %v1504
  %v1567 = vpack.c.bf16 %v1507, %v1506
  %v1568 = vpack.c.bf16 %v1509, %v1508
  %v1569 = vpack.c.bf16 %v1511, %v1510
  %v1570 = vpack.c.bf16 %v1513, %v1512
  %v1571 = vpack.c.bf16 %v1515, %v1514
  %v1572 = vpack.c.bf16 %v1517, %v1516
  %v1573 = vpack.c.bf16 %v1519, %v1518
  %v1574 = vpack.c.bf16 %v1521, %v1520
  %v1575 = vpack.c.bf16 %v1523, %v1522
  %v1576 = vpack.c.bf16 %v1525, %v1524
  %v1577 = vpack.c.bf16 %v1527, %v1526
  %v1578 = vpack.c.bf16 %v1529, %v1528
  %v1579 = vpack.c.bf16 %v1531, %v1530
  %v1580 = vpack.c.bf16 %v1533, %v1532
  %v1581 = vpack.c.bf16 %v1535, %v1534
  %v1582 = vpack.c.bf16 %v1537, %v1536
  %v1583 = vpack.c.bf16 %v1539, %v1538
  %v1584 = vpack.c.bf16 %v1541, %v1540
  %v1585 = vpack.c.bf16 %v1543, %v1542
  %v1586 = vpack.c.bf16 %v1545, %v1544
  %v1587 = vpack.c.bf16 %v1547, %v1546
  %v1588 = vpack.c.bf16 %v1549, %v1548
  %v1589 = vpack.c.bf16 %v1551, %v1550
  %v1590 = vpack.c.bf16 %v1553, %v1552
  %v1591 = vpack.c.bf16 %v1555, %v1554
  %v1592 = vpack.c.bf16 %v1557, %v1556
  %v1593 = vpack.c.bf16 %v1559, %v1558
  %v1594 = vpack.c.bf16 %v1561, %v1560
  %v1595 = vpack.c.bf16 %v1563, %v1562
  %v1596 = vld [vmem:[%s7] sm:$0xf]
  %v1597 = vld [vmem:[%s7 + $0x4] sm:$0xf]
  %v1598 = vld [vmem:[%s7 + $0x8] sm:$0xf]
  %v1599 = vld [vmem:[%s7 + $0xc] sm:$0xf]
  %v1600 = vld [vmem:[%s7 + $0x10] sm:$0xf]
  %v1601 = vld [vmem:[%s7 + $0x14] sm:$0xf]
  %v1602 = vld [vmem:[%s7 + $0x18] sm:$0xf]
  %v1603 = vld [vmem:[%s7 + $0x1c] sm:$0xf]
  %v1604 = vld [vmem:[%s8] sm:$0x1]
  %v1606 = vlaneseq
  %v1607 = vshrl.u32 %v1606, 7
  %v1608 = vsub.s32 0, %v1607
  %v1609 = vrot.slane %v1604, %v1608
  %v1619 = vunpack.c.l.b16 %v1596
  %v1620 = vunpack.c.l.b16 %v1597
  %v1621 = vunpack.c.l.b16 %v1598
  %v1622 = vunpack.c.l.b16 %v1599
  %v1623 = vunpack.c.l.b16 %v1600
  %v1624 = vunpack.c.l.b16 %v1601
  %v1625 = vunpack.c.l.b16 %v1602
  %v1626 = vunpack.c.l.b16 %v1603
  %v1627 = vpack.c.b16 %v1620, %v1619
  %v1628 = vpack.c.b16 %v1622, %v1621
  %v1629 = vpack.c.b16 %v1624, %v1623
  %v1630 = vpack.c.b16 %v1626, %v1625
  %v1636 = vsel %vm681, %v1564, 0
  %v1639 = vsel %vm681, %v1565, 0
  %v1642 = vsel %vm681, %v1566, 0
  %v1645 = vsel %vm681, %v1567, 0
  %v1648 = vsel %vm681, %v1568, 0
  %v1651 = vsel %vm681, %v1569, 0
  %v1654 = vsel %vm681, %v1570, 0
  %v1657 = vsel %vm681, %v1571, 0
  %v1660 = vsel %vm681, %v1572, 0
  %v1663 = vsel %vm681, %v1573, 0
  %v1666 = vsel %vm681, %v1574, 0
  %v1669 = vsel %vm681, %v1575, 0
  %v1672 = vsel %vm681, %v1576, 0
  %v1675 = vsel %vm681, %v1577, 0
  %v1678 = vsel %vm681, %v1578, 0
  %v1681 = vsel %vm681, %v1579, 0
  %v1684 = vsel %vm681, %v1580, 0
  %v1687 = vsel %vm681, %v1581, 0
  %v1690 = vsel %vm681, %v1582, 0
  %v1693 = vsel %vm681, %v1583, 0
  %v1696 = vsel %vm681, %v1584, 0
  %v1699 = vsel %vm681, %v1585, 0
  %v1702 = vsel %vm681, %v1586, 0
  %v1705 = vsel %vm681, %v1587, 0
  %v1708 = vsel %vm681, %v1588, 0
  %v1711 = vsel %vm681, %v1589, 0
  %v1714 = vsel %vm681, %v1590, 0
  %v1717 = vsel %vm681, %v1591, 0
  %v1720 = vsel %vm681, %v1592, 0
  %v1723 = vsel %vm681, %v1593, 0
  %v1726 = vsel %vm681, %v1594, 0
  %v1729 = vsel %vm681, %v1595, 0
  %1731 = vmatprep.subr.bf16.mxu0 0
  %1732 = vmatpush1.bf16.msra.mxu0 0
  %1733 = vmatprep.subr.bf16.mxu0 0
  %1734 = vmatpush1.bf16.msra.mxu0 0
  %1735 = vmatprep.subr.bf16.mxu0 0
  %1736 = vmatpush1.bf16.msra.mxu0 0
  %1737 = vmatprep.subr.bf16.mxu0 0
  %1738 = vmatpush1.bf16.msra.mxu0 0
  %1739 = vmatprep.subr.bf16.mxu0 0
  %1740 = vmatpush1.bf16.msra.mxu0 %v1630
  %1741 = vmatprep.subr.bf16.mxu0 0
  %1742 = vmatpush1.bf16.msra.mxu0 %v1629
  %1743 = vmatprep.subr.bf16.mxu0 0
  %1744 = vmatpush1.bf16.msra.mxu0 %v1628
  %1745 = vmatprep.subr.bf16.mxu0 0
  %1746 = vmatpush1.bf16.msra.mxu0 %v1627
  %1747 = vmatprep.subr.bf16.mxu0 0
  %1748 = vmatpush2.bf16.msra.mxu0 0
  %1749 = vmatprep.subr.bf16.mxu0 0
  %1750 = vmatpush2.bf16.msra.mxu0 0
  %1751 = vmatprep.subr.bf16.mxu0 0
  %1752 = vmatpush2.bf16.msra.mxu0 0
  %1753 = vmatprep.subr.bf16.mxu0 0
  %1754 = vmatpush2.bf16.msra.mxu0 0
  %1755 = vmatprep.subr.bf16.mxu0 0
  %1756 = vmatpush2.bf16.msra.mxu0 0
  %1757 = vmatprep.subr.bf16.mxu0 0
  %1758 = vmatpush2.bf16.msra.mxu0 0
  %1759 = vmatprep.subr.bf16.mxu0 0
  %1760 = vmatpush2.bf16.msra.mxu0 0
  %1761 = vmatprep.subr.bf16.mxu0 0
  %1762 = vmatpush2.bf16.msra.mxu0 0
  %1763 = vmatprep.mubr.bf16.mxu0 0
  %1764 = vmatmul.mubr.bf16.gmra.mxu0 %v1636
  %v1765 = vpop.f32.mrf.mxu0
  %v1766 = vadd.f32 %v1609, %v1765
  %v1767 = vpop.f32.mrf.mxu0
  %v1768 = vpop.f32.mrf.mxu0
  %v1769 = vadd.f32 %v1609, %v1768
  %v1770 = vpop.f32.mrf.mxu0
  %1771 = vmatprep.mubr.bf16.mxu0 0
  %1772 = vmatmul.mubr.bf16.gmra.mxu0 %v1639
  %v1773 = vpop.f32.mrf.mxu0
  %v1774 = vadd.f32 %v1609, %v1773
  %v1775 = vpop.f32.mrf.mxu0
  %v1776 = vpop.f32.mrf.mxu0
  %v1777 = vadd.f32 %v1609, %v1776
  %v1778 = vpop.f32.mrf.mxu0
  %1779 = vmatprep.mubr.bf16.mxu0 0
  %1780 = vmatmul.mubr.bf16.gmra.mxu0 %v1642
  %v1781 = vpop.f32.mrf.mxu0
  %v1782 = vadd.f32 %v1609, %v1781
  %v1783 = vpop.f32.mrf.mxu0
  %v1784 = vpop.f32.mrf.mxu0
  %v1785 = vadd.f32 %v1609, %v1784
  %v1786 = vpop.f32.mrf.mxu0
  %1787 = vmatprep.mubr.bf16.mxu0 0
  %1788 = vmatmul.mubr.bf16.gmra.mxu0 %v1645
  %v1789 = vpop.f32.mrf.mxu0
  %v1790 = vadd.f32 %v1609, %v1789
  %v1791 = vpop.f32.mrf.mxu0
  %v1792 = vpop.f32.mrf.mxu0
  %v1793 = vadd.f32 %v1609, %v1792
  %v1794 = vpop.f32.mrf.mxu0
  %1795 = vmatprep.mubr.bf16.mxu0 0
  %1796 = vmatmul.mubr.bf16.gmra.mxu0 %v1648
  %v1797 = vpop.f32.mrf.mxu0
  %v1798 = vadd.f32 %v1609, %v1797
  %v1799 = vpop.f32.mrf.mxu0
  %v1800 = vpop.f32.mrf.mxu0
  %v1801 = vadd.f32 %v1609, %v1800
  %v1802 = vpop.f32.mrf.mxu0
  %1803 = vmatprep.mubr.bf16.mxu0 0
  %1804 = vmatmul.mubr.bf16.gmra.mxu0 %v1651
  %v1805 = vpop.f32.mrf.mxu0
  %v1806 = vadd.f32 %v1609, %v1805
  %v1807 = vpop.f32.mrf.mxu0
  %v1808 = vpop.f32.mrf.mxu0
  %v1809 = vadd.f32 %v1609, %v1808
  %v1810 = vpop.f32.mrf.mxu0
  %1811 = vmatprep.mubr.bf16.mxu0 0
  %1812 = vmatmul.mubr.bf16.gmra.mxu0 %v1654
  %v1813 = vpop.f32.mrf.mxu0
  %v1814 = vadd.f32 %v1609, %v1813
  %v1815 = vpop.f32.mrf.mxu0
  %v1816 = vpop.f32.mrf.mxu0
  %v1817 = vadd.f32 %v1609, %v1816
  %v1818 = vpop.f32.mrf.mxu0
  %1819 = vmatprep.mubr.bf16.mxu0 0
  %1820 = vmatmul.mubr.bf16.gmra.mxu0 %v1657
  %v1821 = vpop.f32.mrf.mxu0
  %v1822 = vadd.f32 %v1609, %v1821
  %v1823 = vpop.f32.mrf.mxu0
  %v1824 = vpop.f32.mrf.mxu0
  %v1825 = vadd.f32 %v1609, %v1824
  %v1826 = vpop.f32.mrf.mxu0
  %1827 = vmatprep.mubr.bf16.mxu0 0
  %1828 = vmatmul.mubr.bf16.gmra.mxu0 %v1660
  %v1829 = vpop.f32.mrf.mxu0
  %v1830 = vadd.f32 %v1609, %v1829
  %v1831 = vpop.f32.mrf.mxu0
  %v1832 = vpop.f32.mrf.mxu0
  %v1833 = vadd.f32 %v1609, %v1832
  %v1834 = vpop.f32.mrf.mxu0
  %1835 = vmatprep.mubr.bf16.mxu0 0
  %1836 = vmatmul.mubr.bf16.gmra.mxu0 %v1663
  %v1837 = vpop.f32.mrf.mxu0
  %v1838 = vadd.f32 %v1609, %v1837
  %v1839 = vpop.f32.mrf.mxu0
  %v1840 = vpop.f32.mrf.mxu0
  %v1841 = vadd.f32 %v1609, %v1840
  %v1842 = vpop.f32.mrf.mxu0
  %1843 = vmatprep.mubr.bf16.mxu0 0
  %1844 = vmatmul.mubr.bf16.gmra.mxu0 %v1666
  %v1845 = vpop.f32.mrf.mxu0
  %v1846 = vadd.f32 %v1609, %v1845
  %v1847 = vpop.f32.mrf.mxu0
  %v1848 = vpop.f32.mrf.mxu0
  %v1849 = vadd.f32 %v1609, %v1848
  %v1850 = vpop.f32.mrf.mxu0
  %1851 = vmatprep.mubr.bf16.mxu0 0
  %1852 = vmatmul.mubr.bf16.gmra.mxu0 %v1669
  %v1853 = vpop.f32.mrf.mxu0
  %v1854 = vadd.f32 %v1609, %v1853
  %v1855 = vpop.f32.mrf.mxu0
  %v1856 = vpop.f32.mrf.mxu0
  %v1857 = vadd.f32 %v1609, %v1856
  %v1858 = vpop.f32.mrf.mxu0
  %1859 = vmatprep.mubr.bf16.mxu0 0
  %1860 = vmatmul.mubr.bf16.gmra.mxu0 %v1672
  %v1861 = vpop.f32.mrf.mxu0
  %v1862 = vadd.f32 %v1609, %v1861
  %v1863 = vpop.f32.mrf.mxu0
  %v1864 = vpop.f32.mrf.mxu0
  %v1865 = vadd.f32 %v1609, %v1864
  %v1866 = vpop.f32.mrf.mxu0
  %1867 = vmatprep.mubr.bf16.mxu0 0
  %1868 = vmatmul.mubr.bf16.gmra.mxu0 %v1675
  %v1869 = vpop.f32.mrf.mxu0
  %v1870 = vadd.f32 %v1609, %v1869
  %v1871 = vpop.f32.mrf.mxu0
  %v1872 = vpop.f32.mrf.mxu0
  %v1873 = vadd.f32 %v1609, %v1872
  %v1874 = vpop.f32.mrf.mxu0
  %1875 = vmatprep.mubr.bf16.mxu0 0
  %1876 = vmatmul.mubr.bf16.gmra.mxu0 %v1678
  %v1877 = vpop.f32.mrf.mxu0
  %v1878 = vadd.f32 %v1609, %v1877
  %v1879 = vpop.f32.mrf.mxu0
  %v1880 = vpop.f32.mrf.mxu0
  %v1881 = vadd.f32 %v1609, %v1880
  %v1882 = vpop.f32.mrf.mxu0
  %1883 = vmatprep.mubr.bf16.mxu0 0
  %1884 = vmatmul.mubr.bf16.gmra.mxu0 %v1681
  %v1885 = vpop.f32.mrf.mxu0
  %v1886 = vadd.f32 %v1609, %v1885
  %v1887 = vpop.f32.mrf.mxu0
  %v1888 = vpop.f32.mrf.mxu0
  %v1889 = vadd.f32 %v1609, %v1888
  %v1890 = vpop.f32.mrf.mxu0
  %1891 = vmatprep.mubr.bf16.mxu0 0
  %1892 = vmatmul.mubr.bf16.gmra.mxu0 %v1684
  %v1893 = vpop.f32.mrf.mxu0
  %v1894 = vadd.f32 %v1609, %v1893
  %v1895 = vpop.f32.mrf.mxu0
  %v1896 = vpop.f32.mrf.mxu0
  %v1897 = vadd.f32 %v1609, %v1896
  %v1898 = vpop.f32.mrf.mxu0
  %1899 = vmatprep.mubr.bf16.mxu0 0
  %1900 = vmatmul.mubr.bf16.gmra.mxu0 %v1687
  %v1901 = vpop.f32.mrf.mxu0
  %v1902 = vadd.f32 %v1609, %v1901
  %v1903 = vpop.f32.mrf.mxu0
  %v1904 = vpop.f32.mrf.mxu0
  %v1905 = vadd.f32 %v1609, %v1904
  %v1906 = vpop.f32.mrf.mxu0
  %1907 = vmatprep.mubr.bf16.mxu0 0
  %1908 = vmatmul.mubr.bf16.gmra.mxu0 %v1690
  %v1909 = vpop.f32.mrf.mxu0
  %v1910 = vadd.f32 %v1609, %v1909
  %v1911 = vpop.f32.mrf.mxu0
  %v1912 = vpop.f32.mrf.mxu0
  %v1913 = vadd.f32 %v1609, %v1912
  %v1914 = vpop.f32.mrf.mxu0
  %1915 = vmatprep.mubr.bf16.mxu0 0
  %1916 = vmatmul.mubr.bf16.gmra.mxu0 %v1693
  %v1917 = vpop.f32.mrf.mxu0
  %v1918 = vadd.f32 %v1609, %v1917
  %v1919 = vpop.f32.mrf.mxu0
  %v1920 = vpop.f32.mrf.mxu0
  %v1921 = vadd.f32 %v1609, %v1920
  %v1922 = vpop.f32.mrf.mxu0
  %1923 = vmatprep.mubr.bf16.mxu0 0
  %1924 = vmatmul.mubr.bf16.gmra.mxu0 %v1696
  %v1925 = vpop.f32.mrf.mxu0
  %v1926 = vadd.f32 %v1609, %v1925
  %v1927 = vpop.f32.mrf.mxu0
  %v1928 = vpop.f32.mrf.mxu0
  %v1929 = vadd.f32 %v1609, %v1928
  %v1930 = vpop.f32.mrf.mxu0
  %1931 = vmatprep.mubr.bf16.mxu0 0
  %1932 = vmatmul.mubr.bf16.gmra.mxu0 %v1699
  %v1933 = vpop.f32.mrf.mxu0
  %v1934 = vadd.f32 %v1609, %v1933
  %v1935 = vpop.f32.mrf.mxu0
  %v1936 = vpop.f32.mrf.mxu0
  %v1937 = vadd.f32 %v1609, %v1936
  %v1938 = vpop.f32.mrf.mxu0
  %1939 = vmatprep.mubr.bf16.mxu0 0
  %1940 = vmatmul.mubr.bf16.gmra.mxu0 %v1702
  %v1941 = vpop.f32.mrf.mxu0
  %v1942 = vadd.f32 %v1609, %v1941
  %v1943 = vpop.f32.mrf.mxu0
  %v1944 = vpop.f32.mrf.mxu0
  %v1945 = vadd.f32 %v1609, %v1944
  %v1946 = vpop.f32.mrf.mxu0
  %1947 = vmatprep.mubr.bf16.mxu0 0
  %1948 = vmatmul.mubr.bf16.gmra.mxu0 %v1705
  %v1949 = vpop.f32.mrf.mxu0
  %v1950 = vadd.f32 %v1609, %v1949
  %v1951 = vpop.f32.mrf.mxu0
  %v1952 = vpop.f32.mrf.mxu0
  %v1953 = vadd.f32 %v1609, %v1952
  %v1954 = vpop.f32.mrf.mxu0
  %1955 = vmatprep.mubr.bf16.mxu0 0
  %1956 = vmatmul.mubr.bf16.gmra.mxu0 %v1708
  %v1957 = vpop.f32.mrf.mxu0
  %v1958 = vadd.f32 %v1609, %v1957
  %v1959 = vpop.f32.mrf.mxu0
  %v1960 = vpop.f32.mrf.mxu0
  %v1961 = vadd.f32 %v1609, %v1960
  %v1962 = vpop.f32.mrf.mxu0
  %1963 = vmatprep.mubr.bf16.mxu0 0
  %1964 = vmatmul.mubr.bf16.gmra.mxu0 %v1711
  %v1965 = vpop.f32.mrf.mxu0
  %v1966 = vadd.f32 %v1609, %v1965
  %v1967 = vpop.f32.mrf.mxu0
  %v1968 = vpop.f32.mrf.mxu0
  %v1969 = vadd.f32 %v1609, %v1968
  %v1970 = vpop.f32.mrf.mxu0
  %1971 = vmatprep.mubr.bf16.mxu0 0
  %1972 = vmatmul.mubr.bf16.gmra.mxu0 %v1714
  %v1973 = vpop.f32.mrf.mxu0
  %v1974 = vadd.f32 %v1609, %v1973
  %v1975 = vpop.f32.mrf.mxu0
  %v1976 = vpop.f32.mrf.mxu0
  %v1977 = vadd.f32 %v1609, %v1976
  %v1978 = vpop.f32.mrf.mxu0
  %1979 = vmatprep.mubr.bf16.mxu0 0
  %1980 = vmatmul.mubr.bf16.gmra.mxu0 %v1717
  %v1981 = vpop.f32.mrf.mxu0
  %v1982 = vadd.f32 %v1609, %v1981
  %v1983 = vpop.f32.mrf.mxu0
  %v1984 = vpop.f32.mrf.mxu0
  %v1985 = vadd.f32 %v1609, %v1984
  %v1986 = vpop.f32.mrf.mxu0
  %1987 = vmatprep.mubr.bf16.mxu0 0
  %1988 = vmatmul.mubr.bf16.gmra.mxu0 %v1720
  %v1989 = vpop.f32.mrf.mxu0
  %v1990 = vadd.f32 %v1609, %v1989
  %v1991 = vpop.f32.mrf.mxu0
  %v1992 = vpop.f32.mrf.mxu0
  %v1993 = vadd.f32 %v1609, %v1992
  %v1994 = vpop.f32.mrf.mxu0
  %1995 = vmatprep.mubr.bf16.mxu0 0
  %1996 = vmatmul.mubr.bf16.gmra.mxu0 %v1723
  %v1997 = vpop.f32.mrf.mxu0
  %v1998 = vadd.f32 %v1609, %v1997
  %v1999 = vpop.f32.mrf.mxu0
  %v2000 = vpop.f32.mrf.mxu0
  %v2001 = vadd.f32 %v1609, %v2000
  %v2002 = vpop.f32.mrf.mxu0
  %2003 = vmatprep.mubr.bf16.mxu0 0
  %2004 = vmatmul.mubr.bf16.gmra.mxu0 %v1726
  %v2005 = vpop.f32.mrf.mxu0
  %v2006 = vadd.f32 %v1609, %v2005
  %v2007 = vpop.f32.mrf.mxu0
  %v2008 = vpop.f32.mrf.mxu0
  %v2009 = vadd.f32 %v1609, %v2008
  %v2010 = vpop.f32.mrf.mxu0
  %2011 = vmatprep.mubr.bf16.mxu0 0
  %2012 = vmatmul.mubr.bf16.gmra.mxu0 %v1729
  %v2013 = vpop.f32.mrf.mxu0
  %v2014 = vadd.f32 %v1609, %v2013
  %v2015 = vpop.f32.mrf.mxu0
  %v2016 = vpop.f32.mrf.mxu0
  %v2017 = vadd.f32 %v1609, %v2016
  %v2018 = vpop.f32.mrf.mxu0
  %2019 = vdwg.mxu0
  %v2020 = vld [vmem:[%s9] sm:$0x1]
  %v2022 = vlaneseq
  %v2023 = vshrl.u32 %v2022, 7
  %v2024 = vsub.s32 0, %v2023
  %v2025 = vrot.slane %v2020, %v2024
  %2026 = vrot.lane.b32.xlu0 %v2025, 64
  %v2027 = vpop.permute.xlu0 %2026
  %v2029 = vmul.f32 %v1500, %v2027
  %v2030 = vmul.f32 %v1501, %v2027
  %v2031 = vmul.f32 %v1502, %v2027
  %v2032 = vmul.f32 %v1503, %v2027
  %v2033 = vmul.f32 %v1504, %v2027
  %v2034 = vmul.f32 %v1505, %v2027
  %v2035 = vmul.f32 %v1506, %v2027
  %v2036 = vmul.f32 %v1507, %v2027
  %v2037 = vmul.f32 %v1508, %v2027
  %v2038 = vmul.f32 %v1509, %v2027
  %v2039 = vmul.f32 %v1510, %v2027
  %v2040 = vmul.f32 %v1511, %v2027
  %v2041 = vmul.f32 %v1512, %v2027
  %v2042 = vmul.f32 %v1513, %v2027
  %v2043 = vmul.f32 %v1514, %v2027
  %v2044 = vmul.f32 %v1515, %v2027
  %v2045 = vmul.f32 %v1516, %v2027
  %v2046 = vmul.f32 %v1517, %v2027
  %v2047 = vmul.f32 %v1518, %v2027
  %v2048 = vmul.f32 %v1519, %v2027
  %v2049 = vmul.f32 %v1520, %v2027
  %v2050 = vmul.f32 %v1521, %v2027
  %v2051 = vmul.f32 %v1522, %v2027
  %v2052 = vmul.f32 %v1523, %v2027
  %v2053 = vmul.f32 %v1524, %v2027
  %v2054 = vmul.f32 %v1525, %v2027
  %v2055 = vmul.f32 %v1526, %v2027
  %v2056 = vmul.f32 %v1527, %v2027
  %v2057 = vmul.f32 %v1528, %v2027
  %v2058 = vmul.f32 %v1529, %v2027
  %v2059 = vmul.f32 %v1530, %v2027
  %v2060 = vmul.f32 %v1531, %v2027
  %v2061 = vmul.f32 %v1532, %v2027
  %v2062 = vmul.f32 %v1533, %v2027
  %v2063 = vmul.f32 %v1534, %v2027
  %v2064 = vmul.f32 %v1535, %v2027
  %v2065 = vmul.f32 %v1536, %v2027
  %v2066 = vmul.f32 %v1537, %v2027
  %v2067 = vmul.f32 %v1538, %v2027
  %v2068 = vmul.f32 %v1539, %v2027
  %v2069 = vmul.f32 %v1540, %v2027
  %v2070 = vmul.f32 %v1541, %v2027
  %v2071 = vmul.f32 %v1542, %v2027
  %v2072 = vmul.f32 %v1543, %v2027
  %v2073 = vmul.f32 %v1544, %v2027
  %v2074 = vmul.f32 %v1545, %v2027
  %v2075 = vmul.f32 %v1546, %v2027
  %v2076 = vmul.f32 %v1547, %v2027
  %v2077 = vmul.f32 %v1548, %v2027
  %v2078 = vmul.f32 %v1549, %v2027
  %v2079 = vmul.f32 %v1550, %v2027
  %v2080 = vmul.f32 %v1551, %v2027
  %v2081 = vmul.f32 %v1552, %v2027
  %v2082 = vmul.f32 %v1553, %v2027
  %v2083 = vmul.f32 %v1554, %v2027
  %v2084 = vmul.f32 %v1555, %v2027
  %v2085 = vmul.f32 %v1556, %v2027
  %v2086 = vmul.f32 %v1557, %v2027
  %v2087 = vmul.f32 %v1558, %v2027
  %v2088 = vmul.f32 %v1559, %v2027
  %v2089 = vmul.f32 %v1560, %v2027
  %v2090 = vmul.f32 %v1561, %v2027
  %v2091 = vmul.f32 %v1562, %v2027
  %v2092 = vmul.f32 %v1563, %v2027
  %2157 = vrot.lane.b32.xlu0 %v2029, 64
  %v2158 = vpop.permute.xlu0 %2157
  %2159 = vrot.lane.b32.xlu0 %v2030, 64
  %v2160 = vpop.permute.xlu0 %2159
  %2161 = vrot.lane.b32.xlu0 %v2031, 64
  %v2162 = vpop.permute.xlu0 %2161
  %2163 = vrot.lane.b32.xlu0 %v2032, 64
  %v2164 = vpop.permute.xlu0 %2163
  %2165 = vrot.lane.b32.xlu0 %v2033, 64
  %v2166 = vpop.permute.xlu0 %2165
  %2167 = vrot.lane.b32.xlu0 %v2034, 64
  %v2168 = vpop.permute.xlu0 %2167
  %2169 = vrot.lane.b32.xlu0 %v2035, 64
  %v2170 = vpop.permute.xlu0 %2169
  %2171 = vrot.lane.b32.xlu0 %v2036, 64
  %v2172 = vpop.permute.xlu0 %2171
  %2173 = vrot.lane.b32.xlu0 %v2037, 64
  %v2174 = vpop.permute.xlu0 %2173
  %2175 = vrot.lane.b32.xlu0 %v2038, 64
  %v2176 = vpop.permute.xlu0 %2175
  %2177 = vrot.lane.b32.xlu0 %v2039, 64
  %v2178 = vpop.permute.xlu0 %2177
  %2179 = vrot.lane.b32.xlu0 %v2040, 64
  %v2180 = vpop.permute.xlu0 %2179
  %2181 = vrot.lane.b32.xlu0 %v2041, 64
  %v2182 = vpop.permute.xlu0 %2181
  %2183 = vrot.lane.b32.xlu0 %v2042, 64
  %v2184 = vpop.permute.xlu0 %2183
  %2185 = vrot.lane.b32.xlu0 %v2043, 64
  %v2186 = vpop.permute.xlu0 %2185
  %2187 = vrot.lane.b32.xlu0 %v2044, 64
  %v2188 = vpop.permute.xlu0 %2187
  %2189 = vrot.lane.b32.xlu0 %v2045, 64
  %v2190 = vpop.permute.xlu0 %2189
  %2191 = vrot.lane.b32.xlu0 %v2046, 64
  %v2192 = vpop.permute.xlu0 %2191
  %2193 = vrot.lane.b32.xlu0 %v2047, 64
  %v2194 = vpop.permute.xlu0 %2193
  %2195 = vrot.lane.b32.xlu0 %v2048, 64
  %v2196 = vpop.permute.xlu0 %2195
  %2197 = vrot.lane.b32.xlu0 %v2049, 64
  %v2198 = vpop.permute.xlu0 %2197
  %2199 = vrot.lane.b32.xlu0 %v2050, 64
  %v2200 = vpop.permute.xlu0 %2199
  %2201 = vrot.lane.b32.xlu0 %v2051, 64
  %v2202 = vpop.permute.xlu0 %2201
  %2203 = vrot.lane.b32.xlu0 %v2052, 64
  %v2204 = vpop.permute.xlu0 %2203
  %2205 = vrot.lane.b32.xlu0 %v2053, 64
  %v2206 = vpop.permute.xlu0 %2205
  %2207 = vrot.lane.b32.xlu0 %v2054, 64
  %v2208 = vpop.permute.xlu0 %2207
  %2209 = vrot.lane.b32.xlu0 %v2055, 64
  %v2210 = vpop.permute.xlu0 %2209
  %2211 = vrot.lane.b32.xlu0 %v2056, 64
  %v2212 = vpop.permute.xlu0 %2211
  %2213 = vrot.lane.b32.xlu0 %v2057, 64
  %v2214 = vpop.permute.xlu0 %2213
  %2215 = vrot.lane.b32.xlu0 %v2058, 64
  %v2216 = vpop.permute.xlu0 %2215
  %2217 = vrot.lane.b32.xlu0 %v2059, 64
  %v2218 = vpop.permute.xlu0 %2217
  %2219 = vrot.lane.b32.xlu0 %v2060, 64
  %v2220 = vpop.permute.xlu0 %2219
  %2221 = vrot.lane.b32.xlu0 %v2061, 64
  %v2222 = vpop.permute.xlu0 %2221
  %2223 = vrot.lane.b32.xlu0 %v2062, 64
  %v2224 = vpop.permute.xlu0 %2223
  %2225 = vrot.lane.b32.xlu0 %v2063, 64
  %v2226 = vpop.permute.xlu0 %2225
  %2227 = vrot.lane.b32.xlu0 %v2064, 64
  %v2228 = vpop.permute.xlu0 %2227
  %2229 = vrot.lane.b32.xlu0 %v2065, 64
  %v2230 = vpop.permute.xlu0 %2229
  %2231 = vrot.lane.b32.xlu0 %v2066, 64
  %v2232 = vpop.permute.xlu0 %2231
  %2233 = vrot.lane.b32.xlu0 %v2067, 64
  %v2234 = vpop.permute.xlu0 %2233
  %2235 = vrot.lane.b32.xlu0 %v2068, 64
  %v2236 = vpop.permute.xlu0 %2235
  %2237 = vrot.lane.b32.xlu0 %v2069, 64
  %v2238 = vpop.permute.xlu0 %2237
  %2239 = vrot.lane.b32.xlu0 %v2070, 64
  %v2240 = vpop.permute.xlu0 %2239
  %2241 = vrot.lane.b32.xlu0 %v2071, 64
  %v2242 = vpop.permute.xlu0 %2241
  %2243 = vrot.lane.b32.xlu0 %v2072, 64
  %v2244 = vpop.permute.xlu0 %2243
  %2245 = vrot.lane.b32.xlu0 %v2073, 64
  %v2246 = vpop.permute.xlu0 %2245
  %2247 = vrot.lane.b32.xlu0 %v2074, 64
  %v2248 = vpop.permute.xlu0 %2247
  %2249 = vrot.lane.b32.xlu0 %v2075, 64
  %v2250 = vpop.permute.xlu0 %2249
  %2251 = vrot.lane.b32.xlu0 %v2076, 64
  %v2252 = vpop.permute.xlu0 %2251
  %2253 = vrot.lane.b32.xlu0 %v2077, 64
  %v2254 = vpop.permute.xlu0 %2253
  %2255 = vrot.lane.b32.xlu0 %v2078, 64
  %v2256 = vpop.permute.xlu0 %2255
  %2257 = vrot.lane.b32.xlu0 %v2079, 64
  %v2258 = vpop.permute.xlu0 %2257
  %2259 = vrot.lane.b32.xlu0 %v2080, 64
  %v2260 = vpop.permute.xlu0 %2259
  %2261 = vrot.lane.b32.xlu0 %v2081, 64
  %v2262 = vpop.permute.xlu0 %2261
  %2263 = vrot.lane.b32.xlu0 %v2082, 64
  %v2264 = vpop.permute.xlu0 %2263
  %2265 = vrot.lane.b32.xlu0 %v2083, 64
  %v2266 = vpop.permute.xlu0 %2265
  %2267 = vrot.lane.b32.xlu0 %v2084, 64
  %v2268 = vpop.permute.xlu0 %2267
  %2269 = vrot.lane.b32.xlu0 %v2085, 64
  %v2270 = vpop.permute.xlu0 %2269
  %2271 = vrot.lane.b32.xlu0 %v2086, 64
  %v2272 = vpop.permute.xlu0 %2271
  %2273 = vrot.lane.b32.xlu0 %v2087, 64
  %v2274 = vpop.permute.xlu0 %2273
  %2275 = vrot.lane.b32.xlu0 %v2088, 64
  %v2276 = vpop.permute.xlu0 %2275
  %2277 = vrot.lane.b32.xlu0 %v2089, 64
  %v2278 = vpop.permute.xlu0 %2277
  %2279 = vrot.lane.b32.xlu0 %v2090, 64
  %v2280 = vpop.permute.xlu0 %2279
  %2281 = vrot.lane.b32.xlu0 %v2091, 64
  %v2282 = vpop.permute.xlu0 %2281
  %2283 = vrot.lane.b32.xlu0 %v2092, 64
  %v2284 = vpop.permute.xlu0 %2283
  %vm2349 = vcmask 64512
  %v2350 = vsel %vm2349, %v2158, 0.0
  %2351 = vadd.xlane.f32.xlu0 %v2350
  %v2352 = vpop.xlane.xlu0 %2351
  %v2353 = vsel %vm2349, %v2160, 0.0
  %2354 = vadd.xlane.f32.xlu0 %v2353
  %v2355 = vpop.xlane.xlu0 %2354
  %v2356 = vsel %vm2349, %v2162, 0.0
  %2357 = vadd.xlane.f32.xlu0 %v2356
  %v2358 = vpop.xlane.xlu0 %2357
  %v2359 = vsel %vm2349, %v2164, 0.0
  %2360 = vadd.xlane.f32.xlu0 %v2359
  %v2361 = vpop.xlane.xlu0 %2360
  %v2362 = vsel %vm2349, %v2166, 0.0
  %2363 = vadd.xlane.f32.xlu0 %v2362
  %v2364 = vpop.xlane.xlu0 %2363
  %v2365 = vsel %vm2349, %v2168, 0.0
  %2366 = vadd.xlane.f32.xlu0 %v2365
  %v2367 = vpop.xlane.xlu0 %2366
  %v2368 = vsel %vm2349, %v2170, 0.0
  %2369 = vadd.xlane.f32.xlu0 %v2368
  %v2370 = vpop.xlane.xlu0 %2369
  %v2371 = vsel %vm2349, %v2172, 0.0
  %2372 = vadd.xlane.f32.xlu0 %v2371
  %v2373 = vpop.xlane.xlu0 %2372
  %v2374 = vsel %vm2349, %v2174, 0.0
  %2375 = vadd.xlane.f32.xlu0 %v2374
  %v2376 = vpop.xlane.xlu0 %2375
  %v2377 = vsel %vm2349, %v2176, 0.0
  %2378 = vadd.xlane.f32.xlu0 %v2377
  %v2379 = vpop.xlane.xlu0 %2378
  %v2380 = vsel %vm2349, %v2178, 0.0
  %2381 = vadd.xlane.f32.xlu0 %v2380
  %v2382 = vpop.xlane.xlu0 %2381
  %v2383 = vsel %vm2349, %v2180, 0.0
  %2384 = vadd.xlane.f32.xlu0 %v2383
  %v2385 = vpop.xlane.xlu0 %2384
  %v2386 = vsel %vm2349, %v2182, 0.0
  %2387 = vadd.xlane.f32.xlu0 %v2386
  %v2388 = vpop.xlane.xlu0 %2387
  %v2389 = vsel %vm2349, %v2184, 0.0
  %2390 = vadd.xlane.f32.xlu0 %v2389
  %v2391 = vpop.xlane.xlu0 %2390
  %v2392 = vsel %vm2349, %v2186, 0.0
  %2393 = vadd.xlane.f32.xlu0 %v2392
  %v2394 = vpop.xlane.xlu0 %2393
  %v2395 = vsel %vm2349, %v2188, 0.0
  %2396 = vadd.xlane.f32.xlu0 %v2395
  %v2397 = vpop.xlane.xlu0 %2396
  %v2398 = vsel %vm2349, %v2190, 0.0
  %2399 = vadd.xlane.f32.xlu0 %v2398
  %v2400 = vpop.xlane.xlu0 %2399
  %v2401 = vsel %vm2349, %v2192, 0.0
  %2402 = vadd.xlane.f32.xlu0 %v2401
  %v2403 = vpop.xlane.xlu0 %2402
  %v2404 = vsel %vm2349, %v2194, 0.0
  %2405 = vadd.xlane.f32.xlu0 %v2404
  %v2406 = vpop.xlane.xlu0 %2405
  %v2407 = vsel %vm2349, %v2196, 0.0
  %2408 = vadd.xlane.f32.xlu0 %v2407
  %v2409 = vpop.xlane.xlu0 %2408
  %v2410 = vsel %vm2349, %v2198, 0.0
  %2411 = vadd.xlane.f32.xlu0 %v2410
  %v2412 = vpop.xlane.xlu0 %2411
  %v2413 = vsel %vm2349, %v2200, 0.0
  %2414 = vadd.xlane.f32.xlu0 %v2413
  %v2415 = vpop.xlane.xlu0 %2414
  %v2416 = vsel %vm2349, %v2202, 0.0
  %2417 = vadd.xlane.f32.xlu0 %v2416
  %v2418 = vpop.xlane.xlu0 %2417
  %v2419 = vsel %vm2349, %v2204, 0.0
  %2420 = vadd.xlane.f32.xlu0 %v2419
  %v2421 = vpop.xlane.xlu0 %2420
  %v2422 = vsel %vm2349, %v2206, 0.0
  %2423 = vadd.xlane.f32.xlu0 %v2422
  %v2424 = vpop.xlane.xlu0 %2423
  %v2425 = vsel %vm2349, %v2208, 0.0
  %2426 = vadd.xlane.f32.xlu0 %v2425
  %v2427 = vpop.xlane.xlu0 %2426
  %v2428 = vsel %vm2349, %v2210, 0.0
  %2429 = vadd.xlane.f32.xlu0 %v2428
  %v2430 = vpop.xlane.xlu0 %2429
  %v2431 = vsel %vm2349, %v2212, 0.0
  %2432 = vadd.xlane.f32.xlu0 %v2431
  %v2433 = vpop.xlane.xlu0 %2432
  %v2434 = vsel %vm2349, %v2214, 0.0
  %2435 = vadd.xlane.f32.xlu0 %v2434
  %v2436 = vpop.xlane.xlu0 %2435
  %v2437 = vsel %vm2349, %v2216, 0.0
  %2438 = vadd.xlane.f32.xlu0 %v2437
  %v2439 = vpop.xlane.xlu0 %2438
  %v2440 = vsel %vm2349, %v2218, 0.0
  %2441 = vadd.xlane.f32.xlu0 %v2440
  %v2442 = vpop.xlane.xlu0 %2441
  %v2443 = vsel %vm2349, %v2220, 0.0
  %2444 = vadd.xlane.f32.xlu0 %v2443
  %v2445 = vpop.xlane.xlu0 %2444
  %v2446 = vsel %vm2349, %v2222, 0.0
  %2447 = vadd.xlane.f32.xlu0 %v2446
  %v2448 = vpop.xlane.xlu0 %2447
  %v2449 = vsel %vm2349, %v2224, 0.0
  %2450 = vadd.xlane.f32.xlu0 %v2449
  %v2451 = vpop.xlane.xlu0 %2450
  %v2452 = vsel %vm2349, %v2226, 0.0
  %2453 = vadd.xlane.f32.xlu0 %v2452
  %v2454 = vpop.xlane.xlu0 %2453
  %v2455 = vsel %vm2349, %v2228, 0.0
  %2456 = vadd.xlane.f32.xlu0 %v2455
  %v2457 = vpop.xlane.xlu0 %2456
  %v2458 = vsel %vm2349, %v2230, 0.0
  %2459 = vadd.xlane.f32.xlu0 %v2458
  %v2460 = vpop.xlane.xlu0 %2459
  %v2461 = vsel %vm2349, %v2232, 0.0
  %2462 = vadd.xlane.f32.xlu0 %v2461
  %v2463 = vpop.xlane.xlu0 %2462
  %v2464 = vsel %vm2349, %v2234, 0.0
  %2465 = vadd.xlane.f32.xlu0 %v2464
  %v2466 = vpop.xlane.xlu0 %2465
  %v2467 = vsel %vm2349, %v2236, 0.0
  %2468 = vadd.xlane.f32.xlu0 %v2467
  %v2469 = vpop.xlane.xlu0 %2468
  %v2470 = vsel %vm2349, %v2238, 0.0
  %2471 = vadd.xlane.f32.xlu0 %v2470
  %v2472 = vpop.xlane.xlu0 %2471
  %v2473 = vsel %vm2349, %v2240, 0.0
  %2474 = vadd.xlane.f32.xlu0 %v2473
  %v2475 = vpop.xlane.xlu0 %2474
  %v2476 = vsel %vm2349, %v2242, 0.0
  %2477 = vadd.xlane.f32.xlu0 %v2476
  %v2478 = vpop.xlane.xlu0 %2477
  %v2479 = vsel %vm2349, %v2244, 0.0
  %2480 = vadd.xlane.f32.xlu0 %v2479
  %v2481 = vpop.xlane.xlu0 %2480
  %v2482 = vsel %vm2349, %v2246, 0.0
  %2483 = vadd.xlane.f32.xlu0 %v2482
  %v2484 = vpop.xlane.xlu0 %2483
  %v2485 = vsel %vm2349, %v2248, 0.0
  %2486 = vadd.xlane.f32.xlu0 %v2485
  %v2487 = vpop.xlane.xlu0 %2486
  %v2488 = vsel %vm2349, %v2250, 0.0
  %2489 = vadd.xlane.f32.xlu0 %v2488
  %v2490 = vpop.xlane.xlu0 %2489
  %v2491 = vsel %vm2349, %v2252, 0.0
  %2492 = vadd.xlane.f32.xlu0 %v2491
  %v2493 = vpop.xlane.xlu0 %2492
  %v2494 = vsel %vm2349, %v2254, 0.0
  %2495 = vadd.xlane.f32.xlu0 %v2494
  %v2496 = vpop.xlane.xlu0 %2495
  %v2497 = vsel %vm2349, %v2256, 0.0
  %2498 = vadd.xlane.f32.xlu0 %v2497
  %v2499 = vpop.xlane.xlu0 %2498
  %v2500 = vsel %vm2349, %v2258, 0.0
  %2501 = vadd.xlane.f32.xlu0 %v2500
  %v2502 = vpop.xlane.xlu0 %2501
  %v2503 = vsel %vm2349, %v2260, 0.0
  %2504 = vadd.xlane.f32.xlu0 %v2503
  %v2505 = vpop.xlane.xlu0 %2504
  %v2506 = vsel %vm2349, %v2262, 0.0
  %2507 = vadd.xlane.f32.xlu0 %v2506
  %v2508 = vpop.xlane.xlu0 %2507
  %v2509 = vsel %vm2349, %v2264, 0.0
  %2510 = vadd.xlane.f32.xlu0 %v2509
  %v2511 = vpop.xlane.xlu0 %2510
  %v2512 = vsel %vm2349, %v2266, 0.0
  %2513 = vadd.xlane.f32.xlu0 %v2512
  %v2514 = vpop.xlane.xlu0 %2513
  %v2515 = vsel %vm2349, %v2268, 0.0
  %2516 = vadd.xlane.f32.xlu0 %v2515
  %v2517 = vpop.xlane.xlu0 %2516
  %v2518 = vsel %vm2349, %v2270, 0.0
  %2519 = vadd.xlane.f32.xlu0 %v2518
  %v2520 = vpop.xlane.xlu0 %2519
  %v2521 = vsel %vm2349, %v2272, 0.0
  %2522 = vadd.xlane.f32.xlu0 %v2521
  %v2523 = vpop.xlane.xlu0 %2522
  %v2524 = vsel %vm2349, %v2274, 0.0
  %2525 = vadd.xlane.f32.xlu0 %v2524
  %v2526 = vpop.xlane.xlu0 %2525
  %v2527 = vsel %vm2349, %v2276, 0.0
  %2528 = vadd.xlane.f32.xlu0 %v2527
  %v2529 = vpop.xlane.xlu0 %2528
  %v2530 = vsel %vm2349, %v2278, 0.0
  %2531 = vadd.xlane.f32.xlu0 %v2530
  %v2532 = vpop.xlane.xlu0 %2531
  %v2533 = vsel %vm2349, %v2280, 0.0
  %2534 = vadd.xlane.f32.xlu0 %v2533
  %v2535 = vpop.xlane.xlu0 %2534
  %v2536 = vsel %vm2349, %v2282, 0.0
  %2537 = vadd.xlane.f32.xlu0 %v2536
  %v2538 = vpop.xlane.xlu0 %2537
  %v2539 = vsel %vm2349, %v2284, 0.0
  %2540 = vadd.xlane.f32.xlu0 %v2539
  %v2541 = vpop.xlane.xlu0 %2540
  %v2542 = vld [vmem:[#allocation2] sm:$0x1]
  %v2544 = vlaneseq
  %v2545 = vshrl.u32 %v2544, 7
  %v2546 = vsub.s32 0, %v2545
  %v2547 = vrot.slane %v2542, %v2546
  %v2549 = vadd.f32 %v2352, %v2547
  %v2550 = vadd.f32 %v2355, %v2547
  %v2551 = vadd.f32 %v2358, %v2547
  %v2552 = vadd.f32 %v2361, %v2547
  %v2553 = vadd.f32 %v2364, %v2547
  %v2554 = vadd.f32 %v2367, %v2547
  %v2555 = vadd.f32 %v2370, %v2547
  %v2556 = vadd.f32 %v2373, %v2547
  %v2557 = vadd.f32 %v2376, %v2547
  %v2558 = vadd.f32 %v2379, %v2547
  %v2559 = vadd.f32 %v2382, %v2547
  %v2560 = vadd.f32 %v2385, %v2547
  %v2561 = vadd.f32 %v2388, %v2547
  %v2562 = vadd.f32 %v2391, %v2547
  %v2563 = vadd.f32 %v2394, %v2547
  %v2564 = vadd.f32 %v2397, %v2547
  %v2565 = vadd.f32 %v2400, %v2547
  %v2566 = vadd.f32 %v2403, %v2547
  %v2567 = vadd.f32 %v2406, %v2547
  %v2568 = vadd.f32 %v2409, %v2547
  %v2569 = vadd.f32 %v2412, %v2547
  %v2570 = vadd.f32 %v2415, %v2547
  %v2571 = vadd.f32 %v2418, %v2547
  %v2572 = vadd.f32 %v2421, %v2547
  %v2573 = vadd.f32 %v2424, %v2547
  %v2574 = vadd.f32 %v2427, %v2547
  %v2575 = vadd.f32 %v2430, %v2547
  %v2576 = vadd.f32 %v2433, %v2547
  %v2577 = vadd.f32 %v2436, %v2547
  %v2578 = vadd.f32 %v2439, %v2547
  %v2579 = vadd.f32 %v2442, %v2547
  %v2580 = vadd.f32 %v2445, %v2547
  %v2581 = vadd.f32 %v2448, %v2547
  %v2582 = vadd.f32 %v2451, %v2547
  %v2583 = vadd.f32 %v2454, %v2547
  %v2584 = vadd.f32 %v2457, %v2547
  %v2585 = vadd.f32 %v2460, %v2547
  %v2586 = vadd.f32 %v2463, %v2547
  %v2587 = vadd.f32 %v2466, %v2547
  %v2588 = vadd.f32 %v2469, %v2547
  %v2589 = vadd.f32 %v2472, %v2547
  %v2590 = vadd.f32 %v2475, %v2547
  %v2591 = vadd.f32 %v2478, %v2547
  %v2592 = vadd.f32 %v2481, %v2547
  %v2593 = vadd.f32 %v2484, %v2547
  %v2594 = vadd.f32 %v2487, %v2547
  %v2595 = vadd.f32 %v2490, %v2547
  %v2596 = vadd.f32 %v2493, %v2547
  %v2597 = vadd.f32 %v2496, %v2547
  %v2598 = vadd.f32 %v2499, %v2547
  %v2599 = vadd.f32 %v2502, %v2547
  %v2600 = vadd.f32 %v2505, %v2547
  %v2601 = vadd.f32 %v2508, %v2547
  %v2602 = vadd.f32 %v2511, %v2547
  %v2603 = vadd.f32 %v2514, %v2547
  %v2604 = vadd.f32 %v2517, %v2547
  %v2605 = vadd.f32 %v2520, %v2547
  %v2606 = vadd.f32 %v2523, %v2547
  %v2607 = vadd.f32 %v2526, %v2547
  %v2608 = vadd.f32 %v2529, %v2547
  %v2609 = vadd.f32 %v2532, %v2547
  %v2610 = vadd.f32 %v2535, %v2547
  %v2611 = vadd.f32 %v2538, %v2547
  %v2612 = vadd.f32 %v2541, %v2547
  %2677 = vrot.lane.b32.xlu0 %v813, 32
  %v2678 = vpop.permute.xlu0 %2677
  %2679 = vrot.lane.b32.xlu0 %v816, 32
  %v2680 = vpop.permute.xlu0 %2679
  %2681 = vrot.lane.b32.xlu0 %v821, 32
  %v2682 = vpop.permute.xlu0 %2681
  %2683 = vrot.lane.b32.xlu0 %v824, 32
  %v2684 = vpop.permute.xlu0 %2683
  %2685 = vrot.lane.b32.xlu0 %v829, 32
  %v2686 = vpop.permute.xlu0 %2685
  %2687 = vrot.lane.b32.xlu0 %v832, 32
  %v2688 = vpop.permute.xlu0 %2687
  %2689 = vrot.lane.b32.xlu0 %v837, 32
  %v2690 = vpop.permute.xlu0 %2689
  %2691 = vrot.lane.b32.xlu0 %v840, 32
  %v2692 = vpop.permute.xlu0 %2691
  %2693 = vrot.lane.b32.xlu0 %v845, 32
  %v2694 = vpop.permute.xlu0 %2693
  %2695 = vrot.lane.b32.xlu0 %v848, 32
  %v2696 = vpop.permute.xlu0 %2695
  %2697 = vrot.lane.b32.xlu0 %v853, 32
  %v2698 = vpop.permute.xlu0 %2697
  %2699 = vrot.lane.b32.xlu0 %v856, 32
  %v2700 = vpop.permute.xlu0 %2699
  %2701 = vrot.lane.b32.xlu0 %v861, 32
  %v2702 = vpop.permute.xlu0 %2701
  %2703 = vrot.lane.b32.xlu0 %v864, 32
  %v2704 = vpop.permute.xlu0 %2703
  %2705 = vrot.lane.b32.xlu0 %v869, 32
  %v2706 = vpop.permute.xlu0 %2705
  %2707 = vrot.lane.b32.xlu0 %v872, 32
  %v2708 = vpop.permute.xlu0 %2707
  %2709 = vrot.lane.b32.xlu0 %v877, 32
  %v2710 = vpop.permute.xlu0 %2709
  %2711 = vrot.lane.b32.xlu0 %v880, 32
  %v2712 = vpop.permute.xlu0 %2711
  %2713 = vrot.lane.b32.xlu0 %v885, 32
  %v2714 = vpop.permute.xlu0 %2713
  %2715 = vrot.lane.b32.xlu0 %v888, 32
  %v2716 = vpop.permute.xlu0 %2715
  %2717 = vrot.lane.b32.xlu0 %v893, 32
  %v2718 = vpop.permute.xlu0 %2717
  %2719 = vrot.lane.b32.xlu0 %v896, 32
  %v2720 = vpop.permute.xlu0 %2719
  %2721 = vrot.lane.b32.xlu0 %v901, 32
  %v2722 = vpop.permute.xlu0 %2721
  %2723 = vrot.lane.b32.xlu0 %v904, 32
  %v2724 = vpop.permute.xlu0 %2723
  %2725 = vrot.lane.b32.xlu0 %v909, 32
  %v2726 = vpop.permute.xlu0 %2725
  %2727 = vrot.lane.b32.xlu0 %v912, 32
  %v2728 = vpop.permute.xlu0 %2727
  %2729 = vrot.lane.b32.xlu0 %v917, 32
  %v2730 = vpop.permute.xlu0 %2729
  %2731 = vrot.lane.b32.xlu0 %v920, 32
  %v2732 = vpop.permute.xlu0 %2731
  %2733 = vrot.lane.b32.xlu0 %v925, 32
  %v2734 = vpop.permute.xlu0 %2733
  %2735 = vrot.lane.b32.xlu0 %v928, 32
  %v2736 = vpop.permute.xlu0 %2735
  %2737 = vrot.lane.b32.xlu0 %v933, 32
  %v2738 = vpop.permute.xlu0 %2737
  %2739 = vrot.lane.b32.xlu0 %v936, 32
  %v2740 = vpop.permute.xlu0 %2739
  %2741 = vrot.lane.b32.xlu0 %v941, 32
  %v2742 = vpop.permute.xlu0 %2741
  %2743 = vrot.lane.b32.xlu0 %v944, 32
  %v2744 = vpop.permute.xlu0 %2743
  %2745 = vrot.lane.b32.xlu0 %v949, 32
  %v2746 = vpop.permute.xlu0 %2745
  %2747 = vrot.lane.b32.xlu0 %v952, 32
  %v2748 = vpop.permute.xlu0 %2747
  %2749 = vrot.lane.b32.xlu0 %v957, 32
  %v2750 = vpop.permute.xlu0 %2749
  %2751 = vrot.lane.b32.xlu0 %v960, 32
  %v2752 = vpop.permute.xlu0 %2751
  %2753 = vrot.lane.b32.xlu0 %v965, 32
  %v2754 = vpop.permute.xlu0 %2753
  %2755 = vrot.lane.b32.xlu0 %v968, 32
  %v2756 = vpop.permute.xlu0 %2755
  %2757 = vrot.lane.b32.xlu0 %v973, 32
  %v2758 = vpop.permute.xlu0 %2757
  %2759 = vrot.lane.b32.xlu0 %v976, 32
  %v2760 = vpop.permute.xlu0 %2759
  %2761 = vrot.lane.b32.xlu0 %v981, 32
  %v2762 = vpop.permute.xlu0 %2761
  %2763 = vrot.lane.b32.xlu0 %v984, 32
  %v2764 = vpop.permute.xlu0 %2763
  %2765 = vrot.lane.b32.xlu0 %v989, 32
  %v2766 = vpop.permute.xlu0 %2765
  %2767 = vrot.lane.b32.xlu0 %v992, 32
  %v2768 = vpop.permute.xlu0 %2767
  %2769 = vrot.lane.b32.xlu0 %v997, 32
  %v2770 = vpop.permute.xlu0 %2769
  %2771 = vrot.lane.b32.xlu0 %v1000, 32
  %v2772 = vpop.permute.xlu0 %2771
  %2773 = vrot.lane.b32.xlu0 %v1005, 32
  %v2774 = vpop.permute.xlu0 %2773
  %2775 = vrot.lane.b32.xlu0 %v1008, 32
  %v2776 = vpop.permute.xlu0 %2775
  %2777 = vrot.lane.b32.xlu0 %v1013, 32
  %v2778 = vpop.permute.xlu0 %2777
  %2779 = vrot.lane.b32.xlu0 %v1016, 32
  %v2780 = vpop.permute.xlu0 %2779
  %2781 = vrot.lane.b32.xlu0 %v1021, 32
  %v2782 = vpop.permute.xlu0 %2781
  %2783 = vrot.lane.b32.xlu0 %v1024, 32
  %v2784 = vpop.permute.xlu0 %2783
  %2785 = vrot.lane.b32.xlu0 %v1029, 32
  %v2786 = vpop.permute.xlu0 %2785
  %2787 = vrot.lane.b32.xlu0 %v1032, 32
  %v2788 = vpop.permute.xlu0 %2787
  %2789 = vrot.lane.b32.xlu0 %v1037, 32
  %v2790 = vpop.permute.xlu0 %2789
  %2791 = vrot.lane.b32.xlu0 %v1040, 32
  %v2792 = vpop.permute.xlu0 %2791
  %2793 = vrot.lane.b32.xlu0 %v1045, 32
  %v2794 = vpop.permute.xlu0 %2793
  %2795 = vrot.lane.b32.xlu0 %v1048, 32
  %v2796 = vpop.permute.xlu0 %2795
  %2797 = vrot.lane.b32.xlu0 %v1053, 32
  %v2798 = vpop.permute.xlu0 %2797
  %2799 = vrot.lane.b32.xlu0 %v1056, 32
  %v2800 = vpop.permute.xlu0 %2799
  %2801 = vrot.lane.b32.xlu0 %v1061, 32
  %v2802 = vpop.permute.xlu0 %2801
  %2803 = vrot.lane.b32.xlu0 %v1064, 32
  %v2804 = vpop.permute.xlu0 %2803
  %2933 = vrot.lane.b32.xlu0 %v2549, 48
  %v2934 = vpop.permute.xlu0 %2933
  %2935 = vrot.lane.b32.xlu0 %v2550, 48
  %v2936 = vpop.permute.xlu0 %2935
  %2937 = vrot.lane.b32.xlu0 %v2551, 48
  %v2938 = vpop.permute.xlu0 %2937
  %2939 = vrot.lane.b32.xlu0 %v2552, 48
  %v2940 = vpop.permute.xlu0 %2939
  %2941 = vrot.lane.b32.xlu0 %v2553, 48
  %v2942 = vpop.permute.xlu0 %2941
  %2943 = vrot.lane.b32.xlu0 %v2554, 48
  %v2944 = vpop.permute.xlu0 %2943
  %2945 = vrot.lane.b32.xlu0 %v2555, 48
  %v2946 = vpop.permute.xlu0 %2945
  %2947 = vrot.lane.b32.xlu0 %v2556, 48
  %v2948 = vpop.permute.xlu0 %2947
  %2949 = vrot.lane.b32.xlu0 %v2557, 48
  %v2950 = vpop.permute.xlu0 %2949
  %2951 = vrot.lane.b32.xlu0 %v2558, 48
  %v2952 = vpop.permute.xlu0 %2951
  %2953 = vrot.lane.b32.xlu0 %v2559, 48
  %v2954 = vpop.permute.xlu0 %2953
  %2955 = vrot.lane.b32.xlu0 %v2560, 48
  %v2956 = vpop.permute.xlu0 %2955
  %2957 = vrot.lane.b32.xlu0 %v2561, 48
  %v2958 = vpop.permute.xlu0 %2957
  %2959 = vrot.lane.b32.xlu0 %v2562, 48
  %v2960 = vpop.permute.xlu0 %2959
  %2961 = vrot.lane.b32.xlu0 %v2563, 48
  %v2962 = vpop.permute.xlu0 %2961
  %2963 = vrot.lane.b32.xlu0 %v2564, 48
  %v2964 = vpop.permute.xlu0 %2963
  %2965 = vrot.lane.b32.xlu0 %v2565, 48
  %v2966 = vpop.permute.xlu0 %2965
  %2967 = vrot.lane.b32.xlu0 %v2566, 48
  %v2968 = vpop.permute.xlu0 %2967
  %2969 = vrot.lane.b32.xlu0 %v2567, 48
  %v2970 = vpop.permute.xlu0 %2969
  %2971 = vrot.lane.b32.xlu0 %v2568, 48
  %v2972 = vpop.permute.xlu0 %2971
  %2973 = vrot.lane.b32.xlu0 %v2569, 48
  %v2974 = vpop.permute.xlu0 %2973
  %2975 = vrot.lane.b32.xlu0 %v2570, 48
  %v2976 = vpop.permute.xlu0 %2975
  %2977 = vrot.lane.b32.xlu0 %v2571, 48
  %v2978 = vpop.permute.xlu0 %2977
  %2979 = vrot.lane.b32.xlu0 %v2572, 48
  %v2980 = vpop.permute.xlu0 %2979
  %2981 = vrot.lane.b32.xlu0 %v2573, 48
  %v2982 = vpop.permute.xlu0 %2981
  %2983 = vrot.lane.b32.xlu0 %v2574, 48
  %v2984 = vpop.permute.xlu0 %2983
  %2985 = vrot.lane.b32.xlu0 %v2575, 48
  %v2986 = vpop.permute.xlu0 %2985
  %2987 = vrot.lane.b32.xlu0 %v2576, 48
  %v2988 = vpop.permute.xlu0 %2987
  %2989 = vrot.lane.b32.xlu0 %v2577, 48
  %v2990 = vpop.permute.xlu0 %2989
  %2991 = vrot.lane.b32.xlu0 %v2578, 48
  %v2992 = vpop.permute.xlu0 %2991
  %2993 = vrot.lane.b32.xlu0 %v2579, 48
  %v2994 = vpop.permute.xlu0 %2993
  %2995 = vrot.lane.b32.xlu0 %v2580, 48
  %v2996 = vpop.permute.xlu0 %2995
  %2997 = vrot.lane.b32.xlu0 %v2581, 48
  %v2998 = vpop.permute.xlu0 %2997
  %2999 = vrot.lane.b32.xlu0 %v2582, 48
  %v3000 = vpop.permute.xlu0 %2999
  %3001 = vrot.lane.b32.xlu0 %v2583, 48
  %v3002 = vpop.permute.xlu0 %3001
  %3003 = vrot.lane.b32.xlu0 %v2584, 48
  %v3004 = vpop.permute.xlu0 %3003
  %3005 = vrot.lane.b32.xlu0 %v2585, 48
  %v3006 = vpop.permute.xlu0 %3005
  %3007 = vrot.lane.b32.xlu0 %v2586, 48
  %v3008 = vpop.permute.xlu0 %3007
  %3009 = vrot.lane.b32.xlu0 %v2587, 48
  %v3010 = vpop.permute.xlu0 %3009
  %3011 = vrot.lane.b32.xlu0 %v2588, 48
  %v3012 = vpop.permute.xlu0 %3011
  %3013 = vrot.lane.b32.xlu0 %v2589, 48
  %v3014 = vpop.permute.xlu0 %3013
  %3015 = vrot.lane.b32.xlu0 %v2590, 48
  %v3016 = vpop.permute.xlu0 %3015
  %3017 = vrot.lane.b32.xlu0 %v2591, 48
  %v3018 = vpop.permute.xlu0 %3017
  %3019 = vrot.lane.b32.xlu0 %v2592, 48
  %v3020 = vpop.permute.xlu0 %3019
  %3021 = vrot.lane.b32.xlu0 %v2593, 48
  %v3022 = vpop.permute.xlu0 %3021
  %3023 = vrot.lane.b32.xlu0 %v2594, 48
  %v3024 = vpop.permute.xlu0 %3023
  %3025 = vrot.lane.b32.xlu0 %v2595, 48
  %v3026 = vpop.permute.xlu0 %3025
  %3027 = vrot.lane.b32.xlu0 %v2596, 48
  %v3028 = vpop.permute.xlu0 %3027
  %3029 = vrot.lane.b32.xlu0 %v2597, 48
  %v3030 = vpop.permute.xlu0 %3029
  %3031 = vrot.lane.b32.xlu0 %v2598, 48
  %v3032 = vpop.permute.xlu0 %3031
  %3033 = vrot.lane.b32.xlu0 %v2599, 48
  %v3034 = vpop.permute.xlu0 %3033
  %3035 = vrot.lane.b32.xlu0 %v2600, 48
  %v3036 = vpop.permute.xlu0 %3035
  %3037 = vrot.lane.b32.xlu0 %v2601, 48
  %v3038 = vpop.permute.xlu0 %3037
  %3039 = vrot.lane.b32.xlu0 %v2602, 48
  %v3040 = vpop.permute.xlu0 %3039
  %3041 = vrot.lane.b32.xlu0 %v2603, 48
  %v3042 = vpop.permute.xlu0 %3041
  %3043 = vrot.lane.b32.xlu0 %v2604, 48
  %v3044 = vpop.permute.xlu0 %3043
  %3045 = vrot.lane.b32.xlu0 %v2605, 48
  %v3046 = vpop.permute.xlu0 %3045
  %3047 = vrot.lane.b32.xlu0 %v2606, 48
  %v3048 = vpop.permute.xlu0 %3047
  %3049 = vrot.lane.b32.xlu0 %v2607, 48
  %v3050 = vpop.permute.xlu0 %3049
  %3051 = vrot.lane.b32.xlu0 %v2608, 48
  %v3052 = vpop.permute.xlu0 %3051
  %3053 = vrot.lane.b32.xlu0 %v2609, 48
  %v3054 = vpop.permute.xlu0 %3053
  %3055 = vrot.lane.b32.xlu0 %v2610, 48
  %v3056 = vpop.permute.xlu0 %3055
  %3057 = vrot.lane.b32.xlu0 %v2611, 48
  %v3058 = vpop.permute.xlu0 %3057
  %3059 = vrot.lane.b32.xlu0 %v2612, 48
  %v3060 = vpop.permute.xlu0 %3059
  %v3125 = vsel %vm160, %v1766, %v2678
  %v3126 = vsel %vm160, %v1769, %v2680
  %v3127 = vsel %vm160, %v1774, %v2682
  %v3128 = vsel %vm160, %v1777, %v2684
  %v3129 = vsel %vm160, %v1782, %v2686
  %v3130 = vsel %vm160, %v1785, %v2688
  %v3131 = vsel %vm160, %v1790, %v2690
  %v3132 = vsel %vm160, %v1793, %v2692
  %v3133 = vsel %vm160, %v1798, %v2694
  %v3134 = vsel %vm160, %v1801, %v2696
  %v3135 = vsel %vm160, %v1806, %v2698
  %v3136 = vsel %vm160, %v1809, %v2700
  %v3137 = vsel %vm160, %v1814, %v2702
  %v3138 = vsel %vm160, %v1817, %v2704
  %v3139 = vsel %vm160, %v1822, %v2706
  %v3140 = vsel %vm160, %v1825, %v2708
  %v3141 = vsel %vm160, %v1830, %v2710
  %v3142 = vsel %vm160, %v1833, %v2712
  %v3143 = vsel %vm160, %v1838, %v2714
  %v3144 = vsel %vm160, %v1841, %v2716
  %v3145 = vsel %vm160, %v1846, %v2718
  %v3146 = vsel %vm160, %v1849, %v2720
  %v3147 = vsel %vm160, %v1854, %v2722
  %v3148 = vsel %vm160, %v1857, %v2724
  %v3149 = vsel %vm160, %v1862, %v2726
  %v3150 = vsel %vm160, %v1865, %v2728
  %v3151 = vsel %vm160, %v1870, %v2730
  %v3152 = vsel %vm160, %v1873, %v2732
  %v3153 = vsel %vm160, %v1878, %v2734
  %v3154 = vsel %vm160, %v1881, %v2736
  %v3155 = vsel %vm160, %v1886, %v2738
  %v3156 = vsel %vm160, %v1889, %v2740
  %v3157 = vsel %vm160, %v1894, %v2742
  %v3158 = vsel %vm160, %v1897, %v2744
  %v3159 = vsel %vm160, %v1902, %v2746
  %v3160 = vsel %vm160, %v1905, %v2748
  %v3161 = vsel %vm160, %v1910, %v2750
  %v3162 = vsel %vm160, %v1913, %v2752
  %v3163 = vsel %vm160, %v1918, %v2754
  %v3164 = vsel %vm160, %v1921, %v2756
  %v3165 = vsel %vm160, %v1926, %v2758
  %v3166 = vsel %vm160, %v1929, %v2760
  %v3167 = vsel %vm160, %v1934, %v2762
  %v3168 = vsel %vm160, %v1937, %v2764
  %v3169 = vsel %vm160, %v1942, %v2766
  %v3170 = vsel %vm160, %v1945, %v2768
  %v3171 = vsel %vm160, %v1950, %v2770
  %v3172 = vsel %vm160, %v1953, %v2772
  %v3173 = vsel %vm160, %v1958, %v2774
  %v3174 = vsel %vm160, %v1961, %v2776
  %v3175 = vsel %vm160, %v1966, %v2778
  %v3176 = vsel %vm160, %v1969, %v2780
  %v3177 = vsel %vm160, %v1974, %v2782
  %v3178 = vsel %vm160, %v1977, %v2784
  %v3179 = vsel %vm160, %v1982, %v2786
  %v3180 = vsel %vm160, %v1985, %v2788
  %v3181 = vsel %vm160, %v1990, %v2790
  %v3182 = vsel %vm160, %v1993, %v2792
  %v3183 = vsel %vm160, %v1998, %v2794
  %v3184 = vsel %vm160, %v2001, %v2796
  %v3185 = vsel %vm160, %v2006, %v2798
  %v3186 = vsel %vm160, %v2009, %v2800
  %v3187 = vsel %vm160, %v2014, %v2802
  %v3188 = vsel %vm160, %v2017, %v2804
  %vm3189 = vcmask 392192
  %v3190 = vsel %vm3189, %v3125, %v2934
  %v3191 = vsel %vm3189, %v3126, %v2936
  %v3192 = vsel %vm3189, %v3127, %v2938
  %v3193 = vsel %vm3189, %v3128, %v2940
  %v3194 = vsel %vm3189, %v3129, %v2942
  %v3195 = vsel %vm3189, %v3130, %v2944
  %v3196 = vsel %vm3189, %v3131, %v2946
  %v3197 = vsel %vm3189, %v3132, %v2948
  %v3198 = vsel %vm3189, %v3133, %v2950
  %v3199 = vsel %vm3189, %v3134, %v2952
  %v3200 = vsel %vm3189, %v3135, %v2954
  %v3201 = vsel %vm3189, %v3136, %v2956
  %v3202 = vsel %vm3189, %v3137, %v2958
  %v3203 = vsel %vm3189, %v3138, %v2960
  %v3204 = vsel %vm3189, %v3139, %v2962
  %v3205 = vsel %vm3189, %v3140, %v2964
  %v3206 = vsel %vm3189, %v3141, %v2966
  %v3207 = vsel %vm3189, %v3142, %v2968
  %v3208 = vsel %vm3189, %v3143, %v2970
  %v3209 = vsel %vm3189, %v3144, %v2972
  %v3210 = vsel %vm3189, %v3145, %v2974
  %v3211 = vsel %vm3189, %v3146, %v2976
  %v3212 = vsel %vm3189, %v3147, %v2978
  %v3213 = vsel %vm3189, %v3148, %v2980
  %v3214 = vsel %vm3189, %v3149, %v2982
  %v3215 = vsel %vm3189, %v3150, %v2984
  %v3216 = vsel %vm3189, %v3151, %v2986
  %v3217 = vsel %vm3189, %v3152, %v2988
  %v3218 = vsel %vm3189, %v3153, %v2990
  %v3219 = vsel %vm3189, %v3154, %v2992
  %v3220 = vsel %vm3189, %v3155, %v2994
  %v3221 = vsel %vm3189, %v3156, %v2996
  %v3222 = vsel %vm3189, %v3157, %v2998
  %v3223 = vsel %vm3189, %v3158, %v3000
  %v3224 = vsel %vm3189, %v3159, %v3002
  %v3225 = vsel %vm3189, %v3160, %v3004
  %v3226 = vsel %vm3189, %v3161, %v3006
  %v3227 = vsel %vm3189, %v3162, %v3008
  %v3228 = vsel %vm3189, %v3163, %v3010
  %v3229 = vsel %vm3189, %v3164, %v3012
  %v3230 = vsel %vm3189, %v3165, %v3014
  %v3231 = vsel %vm3189, %v3166, %v3016
  %v3232 = vsel %vm3189, %v3167, %v3018
  %v3233 = vsel %vm3189, %v3168, %v3020
  %v3234 = vsel %vm3189, %v3169, %v3022
  %v3235 = vsel %vm3189, %v3170, %v3024
  %v3236 = vsel %vm3189, %v3171, %v3026
  %v3237 = vsel %vm3189, %v3172, %v3028
  %v3238 = vsel %vm3189, %v3173, %v3030
  %v3239 = vsel %vm3189, %v3174, %v3032
  %v3240 = vsel %vm3189, %v3175, %v3034
  %v3241 = vsel %vm3189, %v3176, %v3036
  %v3242 = vsel %vm3189, %v3177, %v3038
  %v3243 = vsel %vm3189, %v3178, %v3040
  %v3244 = vsel %vm3189, %v3179, %v3042
  %v3245 = vsel %vm3189, %v3180, %v3044
  %v3246 = vsel %vm3189, %v3181, %v3046
  %v3247 = vsel %vm3189, %v3182, %v3048
  %v3248 = vsel %vm3189, %v3183, %v3050
  %v3249 = vsel %vm3189, %v3184, %v3052
  %v3250 = vsel %vm3189, %v3185, %v3054
  %v3251 = vsel %vm3189, %v3186, %v3056
  %v3252 = vsel %vm3189, %v3187, %v3058
  %v3253 = vsel %vm3189, %v3188, %v3060
  %vm3254 = vcmask 400384
  %v3255 = vsel %vm3254, %v3190, 0.0
  %v3256 = vsel %vm3254, %v3191, 0.0
  %v3257 = vsel %vm3254, %v3192, 0.0
  %v3258 = vsel %vm3254, %v3193, 0.0
  %v3259 = vsel %vm3254, %v3194, 0.0
  %v3260 = vsel %vm3254, %v3195, 0.0
  %v3261 = vsel %vm3254, %v3196, 0.0
  %v3262 = vsel %vm3254, %v3197, 0.0
  %v3263 = vsel %vm3254, %v3198, 0.0
  %v3264 = vsel %vm3254, %v3199, 0.0
  %v3265 = vsel %vm3254, %v3200, 0.0
  %v3266 = vsel %vm3254, %v3201, 0.0
  %v3267 = vsel %vm3254, %v3202, 0.0
  %v3268 = vsel %vm3254, %v3203, 0.0
  %v3269 = vsel %vm3254, %v3204, 0.0
  %v3270 = vsel %vm3254, %v3205, 0.0
  %v3271 = vsel %vm3254, %v3206, 0.0
  %v3272 = vsel %vm3254, %v3207, 0.0
  %v3273 = vsel %vm3254, %v3208, 0.0
  %v3274 = vsel %vm3254, %v3209, 0.0
  %v3275 = vsel %vm3254, %v3210, 0.0
  %v3276 = vsel %vm3254, %v3211, 0.0
  %v3277 = vsel %vm3254, %v3212, 0.0
  %v3278 = vsel %vm3254, %v3213, 0.0
  %v3279 = vsel %vm3254, %v3214, 0.0
  %v3280 = vsel %vm3254, %v3215, 0.0
  %v3281 = vsel %vm3254, %v3216, 0.0
  %v3282 = vsel %vm3254, %v3217, 0.0
  %v3283 = vsel %vm3254, %v3218, 0.0
  %v3284 = vsel %vm3254, %v3219, 0.0
  %v3285 = vsel %vm3254, %v3220, 0.0
  %v3286 = vsel %vm3254, %v3221, 0.0
  %v3287 = vsel %vm3254, %v3222, 0.0
  %v3288 = vsel %vm3254, %v3223, 0.0
  %v3289 = vsel %vm3254, %v3224, 0.0
  %v3290 = vsel %vm3254, %v3225, 0.0
  %v3291 = vsel %vm3254, %v3226, 0.0
  %v3292 = vsel %vm3254, %v3227, 0.0
  %v3293 = vsel %vm3254, %v3228, 0.0
  %v3294 = vsel %vm3254, %v3229, 0.0
  %v3295 = vsel %vm3254, %v3230, 0.0
  %v3296 = vsel %vm3254, %v3231, 0.0
  %v3297 = vsel %vm3254, %v3232, 0.0
  %v3298 = vsel %vm3254, %v3233, 0.0
  %v3299 = vsel %vm3254, %v3234, 0.0
  %v3300 = vsel %vm3254, %v3235, 0.0
  %v3301 = vsel %vm3254, %v3236, 0.0
  %v3302 = vsel %vm3254, %v3237, 0.0
  %v3303 = vsel %vm3254, %v3238, 0.0
  %v3304 = vsel %vm3254, %v3239, 0.0
  %v3305 = vsel %vm3254, %v3240, 0.0
  %v3306 = vsel %vm3254, %v3241, 0.0
  %v3307 = vsel %vm3254, %v3242, 0.0
  %v3308 = vsel %vm3254, %v3243, 0.0
  %v3309 = vsel %vm3254, %v3244, 0.0
  %v3310 = vsel %vm3254, %v3245, 0.0
  %v3311 = vsel %vm3254, %v3246, 0.0
  %v3312 = vsel %vm3254, %v3247, 0.0
  %v3313 = vsel %vm3254, %v3248, 0.0
  %v3314 = vsel %vm3254, %v3249, 0.0
  %v3315 = vsel %vm3254, %v3250, 0.0
  %v3316 = vsel %vm3254, %v3251, 0.0
  %v3317 = vsel %vm3254, %v3252, 0.0
  %v3318 = vsel %vm3254, %v3253, 0.0
  %3319 = vst [vmem:[%s11] sm:$0xff] %v3255
  %3320 = vst [vmem:[%s11 + $0x8] sm:$0xff] %v3256
  %3321 = vst [vmem:[%s11 + $0x10] sm:$0xff] %v3257
  %3322 = vst [vmem:[%s11 + $0x18] sm:$0xff] %v3258
  %3323 = vst [vmem:[%s11 + $0x20] sm:$0xff] %v3259
  %3324 = vst [vmem:[%s11 + $0x28] sm:$0xff] %v3260
  %3325 = vst [vmem:[%s11 + $0x30] sm:$0xff] %v3261
  %3326 = vst [vmem:[%s11 + $0x38] sm:$0xff] %v3262
  %3327 = vst [vmem:[%s11 + $0x40] sm:$0xff] %v3263
  %3328 = vst [vmem:[%s11 + $0x48] sm:$0xff] %v3264
  %3329 = vst [vmem:[%s11 + $0x50] sm:$0xff] %v3265
  %3330 = vst [vmem:[%s11 + $0x58] sm:$0xff] %v3266
  %3331 = vst [vmem:[%s11 + $0x60] sm:$0xff] %v3267
  %3332 = vst [vmem:[%s11 + $0x68] sm:$0xff] %v3268
  %3333 = vst [vmem:[%s11 + $0x70] sm:$0xff] %v3269
  %3334 = vst [vmem:[%s11 + $0x78] sm:$0xff] %v3270
  %3335 = vst [vmem:[%s11 + $0x80] sm:$0xff] %v3271
  %3336 = vst [vmem:[%s11 + $0x88] sm:$0xff] %v3272
  %3337 = vst [vmem:[%s11 + $0x90] sm:$0xff] %v3273
  %3338 = vst [vmem:[%s11 + $0x98] sm:$0xff] %v3274
  %3339 = vst [vmem:[%s11 + $0xa0] sm:$0xff] %v3275
  %3340 = vst [vmem:[%s11 + $0xa8] sm:$0xff] %v3276
  %3341 = vst [vmem:[%s11 + $0xb0] sm:$0xff] %v3277
  %3342 = vst [vmem:[%s11 + $0xb8] sm:$0xff] %v3278
  %3343 = vst [vmem:[%s11 + $0xc0] sm:$0xff] %v3279
  %3344 = vst [vmem:[%s11 + $0xc8] sm:$0xff] %v3280
  %3345 = vst [vmem:[%s11 + $0xd0] sm:$0xff] %v3281
  %3346 = vst [vmem:[%s11 + $0xd8] sm:$0xff] %v3282
  %3347 = vst [vmem:[%s11 + $0xe0] sm:$0xff] %v3283
  %3348 = vst [vmem:[%s11 + $0xe8] sm:$0xff] %v3284
  %3349 = vst [vmem:[%s11 + $0xf0] sm:$0xff] %v3285
  %3350 = vst [vmem:[%s11 + $0xf8] sm:$0xff] %v3286
  %3351 = vst [vmem:[%s11 + $0x100] sm:$0xff] %v3287
  %3352 = vst [vmem:[%s11 + $0x108] sm:$0xff] %v3288
  %3353 = vst [vmem:[%s11 + $0x110] sm:$0xff] %v3289
  %3354 = vst [vmem:[%s11 + $0x118] sm:$0xff] %v3290
  %3355 = vst [vmem:[%s11 + $0x120] sm:$0xff] %v3291
  %3356 = vst [vmem:[%s11 + $0x128] sm:$0xff] %v3292
  %3357 = vst [vmem:[%s11 + $0x130] sm:$0xff] %v3293
  %3358 = vst [vmem:[%s11 + $0x138] sm:$0xff] %v3294
  %3359 = vst [vmem:[%s11 + $0x140] sm:$0xff] %v3295
  %3360 = vst [vmem:[%s11 + $0x148] sm:$0xff] %v3296
  %3361 = vst [vmem:[%s11 + $0x150] sm:$0xff] %v3297
  %3362 = vst [vmem:[%s11 + $0x158] sm:$0xff] %v3298
  %3363 = vst [vmem:[%s11 + $0x160] sm:$0xff] %v3299
  %3364 = vst [vmem:[%s11 + $0x168] sm:$0xff] %v3300
  %3365 = vst [vmem:[%s11 + $0x170] sm:$0xff] %v3301
  %3366 = vst [vmem:[%s11 + $0x178] sm:$0xff] %v3302
  %3367 = vst [vmem:[%s11 + $0x180] sm:$0xff] %v3303
  %3368 = vst [vmem:[%s11 + $0x188] sm:$0xff] %v3304
  %3369 = vst [vmem:[%s11 + $0x190] sm:$0xff] %v3305
  %3370 = vst [vmem:[%s11 + $0x198] sm:$0xff] %v3306
  %3371 = vst [vmem:[%s11 + $0x1a0] sm:$0xff] %v3307
  %3372 = vst [vmem:[%s11 + $0x1a8] sm:$0xff] %v3308
  %3373 = vst [vmem:[%s11 + $0x1b0] sm:$0xff] %v3309
  %3374 = vst [vmem:[%s11 + $0x1b8] sm:$0xff] %v3310
  %3375 = vst [vmem:[%s11 + $0x1c0] sm:$0xff] %v3311
  %3376 = vst [vmem:[%s11 + $0x1c8] sm:$0xff] %v3312
  %3377 = vst [vmem:[%s11 + $0x1d0] sm:$0xff] %v3313
  %3378 = vst [vmem:[%s11 + $0x1d8] sm:$0xff] %v3314
  %3379 = vst [vmem:[%s11 + $0x1e0] sm:$0xff] %v3315
  %3380 = vst [vmem:[%s11 + $0x1e8] sm:$0xff] %v3316
  %3381 = vst [vmem:[%s11 + $0x1f0] sm:$0xff] %v3317
  %3382 = vst [vmem:[%s11 + $0x1f8] sm:$0xff] %v3318
  // Predicated region
  $region46: #{autoencoder_supervised_fwd.1} parent=0 // pred_check
    _
  $region47: #{autoencoder_supervised_fwd.1} parent=0 // pred_check_branch
    %3384 = sbr.rel (0) target = $region49
  $region48: #{autoencoder_supervised_fwd.1} parent=0 // pred_region
    _
  $region49: #{autoencoder_supervised_fwd.1} parent=0 // pred_fallthru
    _
  // Predicated region
  $region50: #{autoencoder_supervised_fwd.1} parent=0 // pred_check
    _
  $region51: #{autoencoder_supervised_fwd.1} parent=0 // pred_check_branch
    %3386 = sbr.rel (0) target = $region53
  $region52: #{autoencoder_supervised_fwd.1} parent=0 // pred_region
    _
  $region53: #{autoencoder_supervised_fwd.1} parent=0 // pred_fallthru
    _

</llo_original>
